<compile_context>
chip_gen: v5e
topology: v5e:2x2
jax: 0.10.0
libtpu: 0.0.40
codegen_flags: <defaults>
</compile_context>

<pallas_src>
import math
from functools import partial

import numpy as np
import jax
import jax.numpy as jnp
from jax.experimental import pallas as pl
from jax.experimental.pallas import tpu as pltpu

# ----------------------------------------------------------------------------
# Kagome-12 adjacency: (sublattice, 15 neighbour indices) per site.
# ----------------------------------------------------------------------------
KAGOME_12_ADJ = [
    (0, [6, 5, 9, 10, 7, 8, 11, 0, 11, 1, 2, 3, 4, 5, 6]),
    (2, [8, 9, 10, 11, 0, 3, 4, 1, 2, 3, 6, 5, 10, 7, 8]),
    (1, [9, 10, 7, 11, 0, 4, 1, 2, 3, 4, 5, 6, 7, 8, 9]),
    (2, [10, 7, 8, 0, 11, 1, 2, 3, 4, 1, 5, 6, 8, 9, 10]),
    (1, [7, 8, 9, 0, 11, 2, 3, 4, 1, 2, 6, 5, 9, 10, 7]),
    (0, [11, 0, 4, 1, 2, 3, 6, 5, 6, 10, 7, 8, 9, 0, 11]),
    (0, [0, 11, 2, 3, 4, 1, 5, 6, 5, 8, 9, 10, 7, 11, 0]),
    (1, [4, 1, 2, 6, 5, 9, 10, 7, 8, 9, 0, 11, 2, 3, 4]),
    (2, [1, 2, 3, 5, 6, 10, 7, 8, 9, 10, 0, 11, 3, 4, 1]),
    (1, [2, 3, 4, 5, 6, 7, 8, 9, 10, 7, 11, 0, 4, 1, 2]),
    (2, [3, 4, 1, 6, 5, 8, 9, 10, 7, 8, 11, 0, 1, 2, 3]),
    (0, [5, 6, 7, 8, 9, 10, 0, 11, 0, 3, 4, 1, 2, 6, 5]),
]

NUMBER_SPINS = 12
CHANNELS = 4
KERNEL_SIZE = 15
SUBLATTICES = 3
ADJ = KAGOME_12_ADJ
REDUCTION = [[i for i in range(NUMBER_SPINS) if ADJ[i][0] == t] for t in range(SUBLATTICES)]

FEAT = CHANNELS * NUMBER_SPINS     # 48 hidden features (channel-major flat layout)
ONES_ROW = FEAT                    # row carrying the constant 1 (bias column)
PAD_DIM = 56                       # FEAT + 1 rounded up to a sublane multiple
TAIL_ROWS = 8                      # tail padded 2 -> 8 rows: unmasked (8, TB) store

BATCH = 1000                       # not a tile multiple: exercises padding path


# ----------------------------------------------------------------------------
# Parameter init (deterministic, PyTorch-kaiming-uniform-like bounds).
# ----------------------------------------------------------------------------
def init_params(key):
    keys = jax.random.split(key, 8)
    convs = []
    cin = 1
    ki = 0
    for _ in range(3):
        fan_in = cin * KERNEL_SIZE
        bound = 1.0 / math.sqrt(fan_in)
        w = jax.random.uniform(keys[ki], (SUBLATTICES, CHANNELS, cin, KERNEL_SIZE),
                               jnp.float32, -bound, bound)
        ki += 1
        b = jax.random.uniform(keys[ki], (SUBLATTICES, CHANNELS),
                               jnp.float32, -bound, bound)
        ki += 1
        convs.append((np.asarray(w), np.asarray(b)))
        cin = CHANNELS
    fb = 1.0 / math.sqrt(CHANNELS * SUBLATTICES)
    wt = jax.random.uniform(keys[6], (2, CHANNELS * SUBLATTICES), jnp.float32, -fb, fb)
    bt = jax.random.uniform(keys[7], (2,), jnp.float32, -fb, fb)
    return {"convs": convs, "tail": (np.asarray(wt), np.asarray(bt))}


# ----------------------------------------------------------------------------
# Host-side glue: lower LatticeConvolution / pooling / tail to dense matrices,
# fold biases (ones-row trick), fold the {0,1}->{-1,+1} map into layer 1, fold
# pooling into the tail, and pack everything into ONE weight buffer.
# Activation flat layout: flat index = channel * N + site (matches NCW .view).
# ----------------------------------------------------------------------------
def dense_conv(w, b, n):
    s_, cout, cin, k = w.shape
    W = np.zeros((cin * n, cout * n), np.float64)
    bias = np.zeros((cout * n,), np.float64)
    for i, (s, idx) in enumerate(ADJ):
        for o in range(cout):
            bias[o * n + i] = b[s, o]
            for c in range(cin):
                for kk in range(k):
                    W[c * n + idx[kk], o * n + i] += w[s, o, c, kk]
    return W, bias


def pool_matrix(c, n):
    P = np.zeros((c * n, c * SUBLATTICES), np.float64)
    for ch in range(c):
        for t, r in enumerate(REDUCTION):
            for i in r:
                P[ch * n + i, ch * SUBLATTICES + t] = 1.0 / len(r)
    return P


def build_packed_weights(params):
    """One (3*PAD_DIM + TAIL_ROWS, PAD_DIM) f32 buffer holding all layers.

    Activation layout carried through the kernel: rows [0:FEAT] = features,
    row ONES_ROW = 1.0 (bias input), rows [FEAT+1:PAD_DIM] = 0.
    """
    dense = []
    for (w, b) in params["convs"]:
        Wd, bd = dense_conv(np.asarray(w, np.float64), np.asarray(b, np.float64),
                            NUMBER_SPINS)
        dense.append((Wd.T, bd))                       # (cout*N, cin*N), (cout*N,)

    mats = []
    # Layer 1: fold spins = 2*bits - 1  ->  W1' = 2*W1, b1' = b1 - rowsum(W1)
    W1t, b1 = dense[0]                                 # (48, 12), (48,)
    M1 = np.zeros((PAD_DIM, PAD_DIM), np.float64)
    M1[:FEAT, :NUMBER_SPINS] = 2.0 * W1t
    M1[:FEAT, ONES_ROW] = b1 - W1t.sum(axis=1)
    M1[ONES_ROW, ONES_ROW] = 1.0                       # relu(1) == 1: carries bias row
    mats.append(M1)
    # Layers 2 & 3: bias folded into column ONES_ROW
    for (Wt_, bd) in dense[1:]:
        M = np.zeros((PAD_DIM, PAD_DIM), np.float64)
        M[:FEAT, :FEAT] = Wt_
        M[:FEAT, ONES_ROW] = bd
        M[ONES_ROW, ONES_ROW] = 1.0
        mats.append(M)
    # Tail: pooling folded in (Wt @ P^T), bias in column ONES_ROW, padded to 8 rows
    P = pool_matrix(CHANNELS, NUMBER_SPINS)            # (C*N, C*S)
    wt, bt = params["tail"]
    Wf = np.asarray(wt, np.float64) @ P.T              # (2, 48)
    Mt = np.zeros((TAIL_ROWS, PAD_DIM), np.float64)
    Mt[:2, :FEAT] = Wf
    Mt[:2, ONES_ROW] = np.asarray(bt, np.float64)
    mats.append(Mt)

    packed = np.concatenate(mats, axis=0).astype(np.float32)   # (176, 56)
    return jnp.asarray(packed)


# ----------------------------------------------------------------------------
# Pallas kernel: in-kernel bit-unpack + fused forward for one batch tile.
# Layout: batch on the lane axis -> all activations are (features, TB).
# ----------------------------------------------------------------------------
def kagome_kernel(xp_ref, w_ref, o_ref):
    packed = xp_ref[...] & ((1 << NUMBER_SPINS) - 1)          # (1, TB) int32, sign-safe
    tb = packed.shape[1]
    row = jax.lax.broadcasted_iota(jnp.int32, (PAD_DIM, tb), 0)
    shift = jnp.minimum(row, NUMBER_SPINS - 1)                # keep shift amount valid
    bits = (packed >> shift) & 1                              # (PAD_DIM, TB)
    # rows [0:12] = bits, row ONES_ROW = 1 (bias input), everything else = 0
    x = jnp.where(row < NUMBER_SPINS, bits,
                  (row == ONES_ROW).astype(jnp.int32)).astype(jnp.float32)

    # Static row-slices of the single packed weight buffer (sublane-aligned).
    w1 = w_ref[pl.ds(0 * PAD_DIM, PAD_DIM), :]
    w2 = w_ref[pl.ds(1 * PAD_DIM, PAD_DIM), :]
    w3 = w_ref[pl.ds(2 * PAD_DIM, PAD_DIM), :]
    wt = w_ref[pl.ds(3 * PAD_DIM, TAIL_ROWS), :]

    h = jnp.maximum(jnp.dot(w1, x, preferred_element_type=jnp.float32), 0.0)
    h = jnp.maximum(jnp.dot(w2, h, preferred_element_type=jnp.float32), 0.0)
    h = jnp.maximum(jnp.dot(w3, h, preferred_element_type=jnp.float32), 0.0)
    o_ref[...] = jnp.dot(wt, h, preferred_element_type=jnp.float32)   # (8, TB), unmasked


def _round_up(x, m):
    return (x + m - 1) // m * m


def _num_parallel_steps():
    """1 grid step on single-TC parts (v5e/v6e); 2 parallel steps on v7x."""
    try:
        kind = jax.devices()[0].device_kind.lower()
        if "v7" in kind:
            return 2
    except Exception:
        pass
    return 1


@partial(jax.jit, static_argnames=("steps",))
def kagome_forward(x_packed, w_packed, *, steps=1):
    B = x_packed.shape[0]
    tb = _round_up(max(1, -(-B // steps)), 128)               # per-step lane extent
    b_pad = steps * tb
    xp = jnp.zeros((1, b_pad), jnp.int32).at[0, :B].set(x_packed.astype(jnp.int32))

    out = pl.pallas_call(
        kagome_kernel,
        out_shape=jax.ShapeDtypeStruct((TAIL_ROWS, b_pad), jnp.float32),
        grid=(steps,),
        in_specs=[
            pl.BlockSpec((1, tb), lambda i: (0, i)),          # packed spins (pipelined)
            pl.BlockSpec(w_packed.shape, lambda i: (0, 0)),   # ONE constant weight DMA
        ],
        out_specs=pl.BlockSpec((TAIL_ROWS, tb), lambda i: (0, i)),  # lane-dense store
        compiler_params=pltpu.CompilerParams(
            dimension_semantics=("parallel",)),
    )(xp, w_packed)

    return out[:2, :B].T                                      # (B, 2)


# ----------------------------------------------------------------------------
# Pure numpy reference (gather-based, float64) for verification.
# ----------------------------------------------------------------------------
def reference_forward_np(x_packed, params):
    xp = np.asarray(x_packed).astype(np.int64)
    bits = ((xp[:, None] >> np.arange(NUMBER_SPINS)) & 1).astype(np.float64)
    x = (bits * 2.0 - 1.0)[:, None, :]                        # (B, 1, N)
    for (w, b) in params["convs"]:
        w = np.asarray(w, np.float64)
        b = np.asarray(b, np.float64)
        outs = []
        for (s, idx) in ADJ:
            patch = x[:, :, idx]                              # (B, Cin, K)
            y = np.einsum("bck,ock->bo", patch, w[s]) + b[s]
            outs.append(y)
        x = np.maximum(np.stack(outs, axis=2), 0.0)           # (B, Cout, N)
    pooled = np.stack([x[:, :, r].mean(axis=2) for r in REDUCTION], axis=2)  # (B, C, 3)
    flat = pooled.reshape(pooled.shape[0], -1)
    wt, bt = params["tail"]
    return flat @ np.asarray(wt, np.float64).T + np.asarray(bt, np.float64)


if __name__ == "__main__":
    key = jax.random.PRNGKey(0)
    k_in, k_par = jax.random.split(key)

    # Packed spin configurations (one int per sample, like the torch module's
    # bit-packed input).  Unpacking happens inside the kernel.
    x_packed = jax.random.randint(k_in, (BATCH,), 0, 2 ** NUMBER_SPINS, dtype=jnp.int32)

    params = init_params(k_par)
    w_packed = build_packed_weights(params)

    steps = _num_parallel_steps()
    out = kagome_forward(x_packed, w_packed, steps=steps)
    out = jax.block_until_ready(out)

    ref = reference_forward_np(np.asarray(x_packed), params)
    err = float(np.max(np.abs(np.asarray(out, np.float64) - ref)))
    assert out.shape == (BATCH, 2), out.shape
    assert err < 1e-3, f"mismatch vs reference: max abs err = {err}"
    print("KERNEL_OK")
</pallas_src>

<mosaic_0001>
module attributes {stable_mosaic.version = 11 : i64} {
  func.func @kagome_kernel(%arg0: i32, %arg1: memref<1x1024xi32, #tpu.memory_space<vmem>>, %arg2: memref<176x56xf32, #tpu.memory_space<vmem>>, %arg3: memref<8x1024xf32, #tpu.memory_space<vmem>>) attributes {dimension_semantics = [#tpu.dimension_semantics<parallel>], iteration_bounds = array<i64: 1>, scalar_prefetch = 0 : i64, scratch_operands = 0 : i64, tpu.core_type = #tpu.core_type<tc>, window_params = [{transform_indices = @transform_0, window_bounds = array<i64: 1, 1024>}, {pipeline_mode = #tpu.pipeline_mode<synchronous>, transform_indices = @transform_1, window_bounds = array<i64: 176, 56>}, {transform_indices = @transform_2, window_bounds = array<i64: 8, 1024>}]} {
    %c0 = arith.constant 0 : index
    %c0_0 = arith.constant 0 : index
    %0 = vector.load %arg1[%c0, %c0_0] : memref<1x1024xi32, #tpu.memory_space<vmem>>, vector<1x1024xi32>
    %c4095_i32 = arith.constant 4095 : i32
    %1 = vector.broadcast %c4095_i32 : i32 to vector<1x1024xi32>
    %2 = arith.andi %0, %1 : vector<1x1024xi32>
    %3 = tpu.iota {dimensions = array<i32: 0>} : vector<56x1024xi32>
    %c11_i32 = arith.constant 11 : i32
    %4 = vector.broadcast %c11_i32 : i32 to vector<56x1024xi32>
    %5 = arith.minsi %3, %4 : vector<56x1024xi32>
    %6 = vector.broadcast %2 : vector<1x1024xi32> to vector<56x1024xi32>
    %7 = arith.shrsi %6, %5 : vector<56x1024xi32>
    %c1_i32 = arith.constant 1 : i32
    %8 = vector.broadcast %c1_i32 : i32 to vector<56x1024xi32>
    %9 = arith.andi %7, %8 : vector<56x1024xi32>
    %c12_i32 = arith.constant 12 : i32
    %10 = vector.broadcast %c12_i32 : i32 to vector<56x1024xi32>
    %11 = arith.cmpi slt, %3, %10 : vector<56x1024xi32>
    %c48_i32 = arith.constant 48 : i32
    %12 = vector.broadcast %c48_i32 : i32 to vector<56x1024xi32>
    %13 = arith.cmpi eq, %3, %12 : vector<56x1024xi32>
    %14 = arith.extui %13 : vector<56x1024xi1> to vector<56x1024xi32>
    %15 = arith.select %11, %9, %14 : vector<56x1024xi1>, vector<56x1024xi32>
    %16 = arith.sitofp %15 : vector<56x1024xi32> to vector<56x1024xf32>
    %c0_1 = arith.constant 0 : index
    %c0_2 = arith.constant 0 : index
    %17 = vector.load %arg2[%c0_1, %c0_2] : memref<176x56xf32, #tpu.memory_space<vmem>>, vector<56x56xf32>
    %c56 = arith.constant 56 : index
    %c0_3 = arith.constant 0 : index
    %18 = vector.load %arg2[%c56, %c0_3] : memref<176x56xf32, #tpu.memory_space<vmem>>, vector<56x56xf32>
    %c112 = arith.constant 112 : index
    %c0_4 = arith.constant 0 : index
    %19 = vector.load %arg2[%c112, %c0_4] : memref<176x56xf32, #tpu.memory_space<vmem>>, vector<56x56xf32>
    %c168 = arith.constant 168 : index
    %c0_5 = arith.constant 0 : index
    %20 = vector.load %arg2[%c168, %c0_5] : memref<176x56xf32, #tpu.memory_space<vmem>>, vector<8x56xf32>
    %cst = arith.constant dense<0.000000e+00> : vector<56x1024xf32>
    %21 = tpu.matmul %17, %16, %cst {dimension_numbers = #tpu.dot_dimension_numbers<[1], [0], [0], [1], [0, 0, 1, 1], [], []>} : vector<56x56xf32>, vector<56x1024xf32>, vector<56x1024xf32> -> vector<56x1024xf32>
    %cst_6 = arith.constant 0.000000e+00 : f32
    %22 = vector.broadcast %cst_6 : f32 to vector<56x1024xf32>
    %23 = arith.maximumf %21, %22 : vector<56x1024xf32>
    %cst_7 = arith.constant dense<0.000000e+00> : vector<56x1024xf32>
    %24 = tpu.matmul %18, %23, %cst_7 {dimension_numbers = #tpu.dot_dimension_numbers<[1], [0], [0], [1], [0, 0, 1, 1], [], []>} : vector<56x56xf32>, vector<56x1024xf32>, vector<56x1024xf32> -> vector<56x1024xf32>
    %cst_8 = arith.constant 0.000000e+00 : f32
    %25 = vector.broadcast %cst_8 : f32 to vector<56x1024xf32>
    %26 = arith.maximumf %24, %25 : vector<56x1024xf32>
    %cst_9 = arith.constant dense<0.000000e+00> : vector<56x1024xf32>
    %27 = tpu.matmul %19, %26, %cst_9 {dimension_numbers = #tpu.dot_dimension_numbers<[1], [0], [0], [1], [0, 0, 1, 1], [], []>} : vector<56x56xf32>, vector<56x1024xf32>, vector<56x1024xf32> -> vector<56x1024xf32>
    %cst_10 = arith.constant 0.000000e+00 : f32
    %28 = vector.broadcast %cst_10 : f32 to vector<56x1024xf32>
    %29 = arith.maximumf %27, %28 : vector<56x1024xf32>
    %cst_11 = arith.constant dense<0.000000e+00> : vector<8x1024xf32>
    %30 = tpu.matmul %20, %29, %cst_11 {dimension_numbers = #tpu.dot_dimension_numbers<[1], [0], [0], [1], [0, 0, 1, 1], [], []>} : vector<8x56xf32>, vector<56x1024xf32>, vector<8x1024xf32> -> vector<8x1024xf32>
    %c0_12 = arith.constant 0 : index
    %c0_13 = arith.constant 0 : index
    %31 = vector.load %arg3[%c0_12, %c0_13] : memref<8x1024xf32, #tpu.memory_space<vmem>>, vector<8x1024xf32>
    tpu.vector_store %arg3[%c0_12, %c0_13], %30 {strides = array<i32>} : memref<8x1024xf32, #tpu.memory_space<vmem>>, vector<8x1024xf32>,
    return
  }
  func.func @transform_0(%arg0: i32) -> (i32, i32) {
    %c0_i32 = arith.constant 0 : i32
    %c0_i32_0 = arith.constant 0 : i32
    return %c0_i32, %arg0 : i32, i32
  }
  func.func @transform_1(%arg0: i32) -> (i32, i32) {
    %c0_i32 = arith.constant 0 : i32
    %c0_i32_0 = arith.constant 0 : i32
    %c0_i32_1 = arith.constant 0 : i32
    return %c0_i32, %c0_i32_0 : i32, i32
  }
  func.func @transform_2(%arg0: i32) -> (i32, i32) {
    %c0_i32 = arith.constant 0 : i32
    %c0_i32_0 = arith.constant 0 : i32
    return %c0_i32, %arg0 : i32, i32
  }
}

</mosaic_0001>

<llo_original>
// kernel: kagome_forward.1
$region0: #{kagome_forward.1}
  #allocation0 [shape = 'u32[]', space=smem, size = 0x4, offset = 0x4, fixed_abs, tag = 'smem constant byte address 0x4 - core index']
  #allocation1 [shape = 'u32[72,128]{1,0:T(1,128)}', space=vmem, size = 0x9000, scoped, tag = 'internal scratch']
  %s0 = inlined_call_operand.vmem [shape: s32[1,1024], index: 0, kind: input, shape index: {}]
  %s1 = inlined_call_operand.vmem [shape: f32[176,56], index: 1, kind: input, shape index: {}]
  %s2 = inlined_call_operand.vmem [shape: f32[8,1024], index: 2, kind: output, shape index: {}]
  %s3 = sld [smem:[#allocation0]]
  $region18: #{kagome_forward.1} parent=0
    _
  %s5 = ssub.s32 1, %s3
  %s6 = scalar_select 0, %s5, %s3
  // Predicated region
  $region2: #{kagome_forward.1} parent=0 // pred_check
    _
  $region3: #{kagome_forward.1} parent=0 // pred_check_branch
    %8 = sbr.rel (0) target = $region5
  $region4: #{kagome_forward.1} parent=0 // pred_region
    _
  $region5: #{kagome_forward.1} parent=0 // pred_fallthru
    _
  // Predicated region
  $region6: #{kagome_forward.1} parent=0 // pred_check
    _
  $region7: #{kagome_forward.1} parent=0 // pred_check_branch
    %10 = sbr.rel (0) target = $region9
  $region8: #{kagome_forward.1} parent=0 // pred_region
    _
  $region9: #{kagome_forward.1} parent=0 // pred_fallthru
    _
  %v11 = vld [vmem:[%s0] sm:$0xff]
  %v12 = vand.u32 %v11, 4095
  %v13 = vlaneseq
  %v14 = vshrl.u32 %v13, 7
  %v15 = vadd.s32 %v14, 8
  %v16 = vadd.s32 %v14, 16
  %v17 = vadd.s32 %v14, 24
  %v18 = vadd.s32 %v14, 32
  %v19 = vadd.s32 %v14, 40
  %v20 = vadd.s32 %v14, 48
  %vm21 = vcmp.lt.s32.totalorder %v14, 11
  %v22 = vsel %vm21, %v14, 11
  %vm23 = vcmp.lt.s32.totalorder %v15, 11
  %v24 = vsel %vm23, %v15, 11
  %vm25 = vcmp.lt.s32.totalorder %v16, 11
  %v26 = vsel %vm25, %v16, 11
  %vm27 = vcmp.lt.s32.totalorder %v17, 11
  %v28 = vsel %vm27, %v17, 11
  %vm29 = vcmp.lt.s32.totalorder %v18, 11
  %v30 = vsel %vm29, %v18, 11
  %vm31 = vcmp.lt.s32.totalorder %v19, 11
  %v32 = vsel %vm31, %v19, 11
  %vm33 = vcmp.lt.s32.totalorder %v20, 11
  %v34 = vsel %vm33, %v20, 11
  %v35 = vperm.slane %v12, 0
  %v36 = vperm.slane %v12, 1
  %v37 = vperm.slane %v12, 2
  %v38 = vperm.slane %v12, 3
  %v39 = vperm.slane %v12, 4
  %v40 = vperm.slane %v12, 5
  %v41 = vperm.slane %v12, 6
  %v42 = vperm.slane %v12, 7
  %v43 = vshra.s32 %v35, %v22
  %v44 = vshra.s32 %v36, %v22
  %v45 = vshra.s32 %v37, %v22
  %v46 = vshra.s32 %v38, %v22
  %v47 = vshra.s32 %v39, %v22
  %v48 = vshra.s32 %v40, %v22
  %v49 = vshra.s32 %v41, %v22
  %v50 = vshra.s32 %v42, %v22
  %v51 = vshra.s32 %v35, %v24
  %v52 = vshra.s32 %v36, %v24
  %v53 = vshra.s32 %v37, %v24
  %v54 = vshra.s32 %v38, %v24
  %v55 = vshra.s32 %v39, %v24
  %v56 = vshra.s32 %v40, %v24
  %v57 = vshra.s32 %v41, %v24
  %v58 = vshra.s32 %v42, %v24
  %v59 = vshra.s32 %v35, %v26
  %v60 = vshra.s32 %v36, %v26
  %v61 = vshra.s32 %v37, %v26
  %v62 = vshra.s32 %v38, %v26
  %v63 = vshra.s32 %v39, %v26
  %v64 = vshra.s32 %v40, %v26
  %v65 = vshra.s32 %v41, %v26
  %v66 = vshra.s32 %v42, %v26
  %v67 = vshra.s32 %v35, %v28
  %v68 = vshra.s32 %v36, %v28
  %v69 = vshra.s32 %v37, %v28
  %v70 = vshra.s32 %v38, %v28
  %v71 = vshra.s32 %v39, %v28
  %v72 = vshra.s32 %v40, %v28
  %v73 = vshra.s32 %v41, %v28
  %v74 = vshra.s32 %v42, %v28
  %v75 = vshra.s32 %v35, %v30
  %v76 = vshra.s32 %v36, %v30
  %v77 = vshra.s32 %v37, %v30
  %v78 = vshra.s32 %v38, %v30
  %v79 = vshra.s32 %v39, %v30
  %v80 = vshra.s32 %v40, %v30
  %v81 = vshra.s32 %v41, %v30
  %v82 = vshra.s32 %v42, %v30
  %v83 = vshra.s32 %v35, %v32
  %v84 = vshra.s32 %v36, %v32
  %v85 = vshra.s32 %v37, %v32
  %v86 = vshra.s32 %v38, %v32
  %v87 = vshra.s32 %v39, %v32
  %v88 = vshra.s32 %v40, %v32
  %v89 = vshra.s32 %v41, %v32
  %v90 = vshra.s32 %v42, %v32
  %v91 = vshra.s32 %v35, %v34
  %v92 = vshra.s32 %v36, %v34
  %v93 = vshra.s32 %v37, %v34
  %v94 = vshra.s32 %v38, %v34
  %v95 = vshra.s32 %v39, %v34
  %v96 = vshra.s32 %v40, %v34
  %v97 = vshra.s32 %v41, %v34
  %v98 = vshra.s32 %v42, %v34
  %v99 = vand.u32 %v43, 1
  %v100 = vand.u32 %v44, 1
  %v101 = vand.u32 %v45, 1
  %v102 = vand.u32 %v46, 1
  %v103 = vand.u32 %v47, 1
  %v104 = vand.u32 %v48, 1
  %v105 = vand.u32 %v49, 1
  %v106 = vand.u32 %v50, 1
  %v107 = vand.u32 %v51, 1
  %v108 = vand.u32 %v52, 1
  %v109 = vand.u32 %v53, 1
  %v110 = vand.u32 %v54, 1
  %v111 = vand.u32 %v55, 1
  %v112 = vand.u32 %v56, 1
  %v113 = vand.u32 %v57, 1
  %v114 = vand.u32 %v58, 1
  %v115 = vand.u32 %v59, 1
  %v116 = vand.u32 %v60, 1
  %v117 = vand.u32 %v61, 1
  %v118 = vand.u32 %v62, 1
  %v119 = vand.u32 %v63, 1
  %v120 = vand.u32 %v64, 1
  %v121 = vand.u32 %v65, 1
  %v122 = vand.u32 %v66, 1
  %v123 = vand.u32 %v67, 1
  %v124 = vand.u32 %v68, 1
  %v125 = vand.u32 %v69, 1
  %v126 = vand.u32 %v70, 1
  %v127 = vand.u32 %v71, 1
  %v128 = vand.u32 %v72, 1
  %v129 = vand.u32 %v73, 1
  %v130 = vand.u32 %v74, 1
  %v131 = vand.u32 %v75, 1
  %v132 = vand.u32 %v76, 1
  %v133 = vand.u32 %v77, 1
  %v134 = vand.u32 %v78, 1
  %v135 = vand.u32 %v79, 1
  %v136 = vand.u32 %v80, 1
  %v137 = vand.u32 %v81, 1
  %v138 = vand.u32 %v82, 1
  %v139 = vand.u32 %v83, 1
  %v140 = vand.u32 %v84, 1
  %v141 = vand.u32 %v85, 1
  %v142 = vand.u32 %v86, 1
  %v143 = vand.u32 %v87, 1
  %v144 = vand.u32 %v88, 1
  %v145 = vand.u32 %v89, 1
  %v146 = vand.u32 %v90, 1
  %v147 = vand.u32 %v91, 1
  %v148 = vand.u32 %v92, 1
  %v149 = vand.u32 %v93, 1
  %v150 = vand.u32 %v94, 1
  %v151 = vand.u32 %v95, 1
  %v152 = vand.u32 %v96, 1
  %v153 = vand.u32 %v97, 1
  %v154 = vand.u32 %v98, 1
  %vm155 = vcmp.lt.s32.totalorder %v14, 12
  %vm156 = vcmp.lt.s32.totalorder %v15, 12
  %vm157 = vcmp.lt.s32.totalorder %v16, 12
  %vm158 = vcmp.lt.s32.totalorder %v17, 12
  %vm159 = vcmp.lt.s32.totalorder %v18, 12
  %vm160 = vcmp.lt.s32.totalorder %v19, 12
  %vm161 = vcmp.lt.s32.totalorder %v20, 12
  %vm162 = vcmp.eq.s32.totalorder %v14, 48
  %vm163 = vcmp.eq.s32.totalorder %v15, 48
  %vm164 = vcmp.eq.s32.totalorder %v16, 48
  %vm165 = vcmp.eq.s32.totalorder %v17, 48
  %vm166 = vcmp.eq.s32.totalorder %v18, 48
  %vm167 = vcmp.eq.s32.totalorder %v19, 48
  %vm168 = vcmp.eq.s32.totalorder %v20, 48
  %v169 = vsel %vm162, 1, 0
  %v170 = vsel %vm163, 1, 0
  %v171 = vsel %vm164, 1, 0
  %v172 = vsel %vm165, 1, 0
  %v173 = vsel %vm166, 1, 0
  %v174 = vsel %vm167, 1, 0
  %v175 = vsel %vm168, 1, 0
  %v176 = vsel %vm155, %v99, %v169
  %v177 = vsel %vm155, %v100, %v169
  %v178 = vsel %vm155, %v101, %v169
  %v179 = vsel %vm155, %v102, %v169
  %v180 = vsel %vm155, %v103, %v169
  %v181 = vsel %vm155, %v104, %v169
  %v182 = vsel %vm155, %v105, %v169
  %v183 = vsel %vm155, %v106, %v169
  %v184 = vsel %vm156, %v107, %v170
  %v185 = vsel %vm156, %v108, %v170
  %v186 = vsel %vm156, %v109, %v170
  %v187 = vsel %vm156, %v110, %v170
  %v188 = vsel %vm156, %v111, %v170
  %v189 = vsel %vm156, %v112, %v170
  %v190 = vsel %vm156, %v113, %v170
  %v191 = vsel %vm156, %v114, %v170
  %v192 = vsel %vm157, %v115, %v171
  %v193 = vsel %vm157, %v116, %v171
  %v194 = vsel %vm157, %v117, %v171
  %v195 = vsel %vm157, %v118, %v171
  %v196 = vsel %vm157, %v119, %v171
  %v197 = vsel %vm157, %v120, %v171
  %v198 = vsel %vm157, %v121, %v171
  %v199 = vsel %vm157, %v122, %v171
  %v200 = vsel %vm158, %v123, %v172
  %v201 = vsel %vm158, %v124, %v172
  %v202 = vsel %vm158, %v125, %v172
  %v203 = vsel %vm158, %v126, %v172
  %v204 = vsel %vm158, %v127, %v172
  %v205 = vsel %vm158, %v128, %v172
  %v206 = vsel %vm158, %v129, %v172
  %v207 = vsel %vm158, %v130, %v172
  %v208 = vsel %vm159, %v131, %v173
  %v209 = vsel %vm159, %v132, %v173
  %v210 = vsel %vm159, %v133, %v173
  %v211 = vsel %vm159, %v134, %v173
  %v212 = vsel %vm159, %v135, %v173
  %v213 = vsel %vm159, %v136, %v173
  %v214 = vsel %vm159, %v137, %v173
  %v215 = vsel %vm159, %v138, %v173
  %v216 = vsel %vm160, %v139, %v174
  %v217 = vsel %vm160, %v140, %v174
  %v218 = vsel %vm160, %v141, %v174
  %v219 = vsel %vm160, %v142, %v174
  %v220 = vsel %vm160, %v143, %v174
  %v221 = vsel %vm160, %v144, %v174
  %v222 = vsel %vm160, %v145, %v174
  %v223 = vsel %vm160, %v146, %v174
  %v224 = vsel %vm161, %v147, %v175
  %v225 = vsel %vm161, %v148, %v175
  %v226 = vsel %vm161, %v149, %v175
  %v227 = vsel %vm161, %v150, %v175
  %v228 = vsel %vm161, %v151, %v175
  %v229 = vsel %vm161, %v152, %v175
  %v230 = vsel %vm161, %v153, %v175
  %v231 = vsel %vm161, %v154, %v175
  %v232 = vcvt.s32.f32 %v176
  %v233 = vcvt.s32.f32 %v177
  %v234 = vcvt.s32.f32 %v178
  %v235 = vcvt.s32.f32 %v179
  %v236 = vcvt.s32.f32 %v180
  %v237 = vcvt.s32.f32 %v181
  %v238 = vcvt.s32.f32 %v182
  %v239 = vcvt.s32.f32 %v183
  %v240 = vcvt.s32.f32 %v184
  %v241 = vcvt.s32.f32 %v185
  %v242 = vcvt.s32.f32 %v186
  %v243 = vcvt.s32.f32 %v187
  %v244 = vcvt.s32.f32 %v188
  %v245 = vcvt.s32.f32 %v189
  %v246 = vcvt.s32.f32 %v190
  %v247 = vcvt.s32.f32 %v191
  %v248 = vcvt.s32.f32 %v192
  %v249 = vcvt.s32.f32 %v193
  %v250 = vcvt.s32.f32 %v194
  %v251 = vcvt.s32.f32 %v195
  %v252 = vcvt.s32.f32 %v196
  %v253 = vcvt.s32.f32 %v197
  %v254 = vcvt.s32.f32 %v198
  %v255 = vcvt.s32.f32 %v199
  %v256 = vcvt.s32.f32 %v200
  %v257 = vcvt.s32.f32 %v201
  %v258 = vcvt.s32.f32 %v202
  %v259 = vcvt.s32.f32 %v203
  %v260 = vcvt.s32.f32 %v204
  %v261 = vcvt.s32.f32 %v205
  %v262 = vcvt.s32.f32 %v206
  %v263 = vcvt.s32.f32 %v207
  %v264 = vcvt.s32.f32 %v208
  %v265 = vcvt.s32.f32 %v209
  %v266 = vcvt.s32.f32 %v210
  %v267 = vcvt.s32.f32 %v211
  %v268 = vcvt.s32.f32 %v212
  %v269 = vcvt.s32.f32 %v213
  %v270 = vcvt.s32.f32 %v214
  %v271 = vcvt.s32.f32 %v215
  %v272 = vcvt.s32.f32 %v216
  %v273 = vcvt.s32.f32 %v217
  %v274 = vcvt.s32.f32 %v218
  %v275 = vcvt.s32.f32 %v219
  %v276 = vcvt.s32.f32 %v220
  %v277 = vcvt.s32.f32 %v221
  %v278 = vcvt.s32.f32 %v222
  %v279 = vcvt.s32.f32 %v223
  %v280 = vcvt.s32.f32 %v224
  %v281 = vcvt.s32.f32 %v225
  %v282 = vcvt.s32.f32 %v226
  %v283 = vcvt.s32.f32 %v227
  %v284 = vcvt.s32.f32 %v228
  %v285 = vcvt.s32.f32 %v229
  %v286 = vcvt.s32.f32 %v230
  %v287 = vcvt.s32.f32 %v231
  %v288 = vld [vmem:[%s1] sm:$0xff]
  %v289 = vld [vmem:[%s1 + $0x8] sm:$0xff]
  %v290 = vld [vmem:[%s1 + $0x10] sm:$0xff]
  %v291 = vld [vmem:[%s1 + $0x18] sm:$0xff]
  %v292 = vld [vmem:[%s1 + $0x20] sm:$0xff]
  %v293 = vld [vmem:[%s1 + $0x28] sm:$0xff]
  %v294 = vld [vmem:[%s1 + $0x30] sm:$0xff]
  %v295 = vld [vmem:[%s1 + $0x38] sm:$0xff]
  %v296 = vld [vmem:[%s1 + $0x40] sm:$0xff]
  %v297 = vld [vmem:[%s1 + $0x48] sm:$0xff]
  %v298 = vld [vmem:[%s1 + $0x50] sm:$0xff]
  %v299 = vld [vmem:[%s1 + $0x58] sm:$0xff]
  %v300 = vld [vmem:[%s1 + $0x60] sm:$0xff]
  %v301 = vld [vmem:[%s1 + $0x68] sm:$0xff]
  %v302 = vld [vmem:[%s1 + $0x70] sm:$0xff]
  %v303 = vld [vmem:[%s1 + $0x78] sm:$0xff]
  %v304 = vld [vmem:[%s1 + $0x80] sm:$0xff]
  %v305 = vld [vmem:[%s1 + $0x88] sm:$0xff]
  %v306 = vld [vmem:[%s1 + $0x90] sm:$0xff]
  %v307 = vld [vmem:[%s1 + $0x98] sm:$0xff]
  %v308 = vld [vmem:[%s1 + $0xa0] sm:$0xff]
  %v309 = vld [vmem:[%s1 + $0xa8] sm:$0xff]
  %vm310 = vcmask 457728
  %v312 = vsel %vm310, %v288, 0
  %v315 = vsel %vm310, %v289, 0
  %v318 = vsel %vm310, %v290, 0
  %v321 = vsel %vm310, %v291, 0
  %v324 = vsel %vm310, %v292, 0
  %v327 = vsel %vm310, %v293, 0
  %v330 = vsel %vm310, %v294, 0
  %332 = vmatpush.msra.mxu0 0.0
  %333 = vmatpush.msra.mxu0 0.0
  %334 = vmatpush.msra.mxu0 0.0
  %335 = vmatpush.msra.mxu0 0.0
  %336 = vmatpush.msra.mxu0 0.0
  %337 = vmatpush.msra.mxu0 0.0
  %338 = vmatpush.msra.mxu0 0.0
  %339 = vmatpush.msra.mxu0 0.0
  %340 = vmatpush.msra.mxu0 0.0
  %341 = vmatpush.msra.mxu0 %v280
  %342 = vmatpush.msra.mxu0 %v272
  %343 = vmatpush.msra.mxu0 %v264
  %344 = vmatpush.msra.mxu0 %v256
  %345 = vmatpush.msra.mxu0 %v248
  %346 = vmatpush.msra.mxu0 %v240
  %347 = vmatpush.msra.mxu0 %v232
  %348 = vmatmul.f32.gmra.mxu0 %v312
  %v349 = vpop.f32.mrf.mxu0
  %v350 = vadd.f32 0.0, %v349
  %351 = vmatmul.f32.gmra.mxu0 %v315
  %v352 = vpop.f32.mrf.mxu0
  %v353 = vadd.f32 0.0, %v352
  %354 = vmatmul.f32.gmra.mxu0 %v318
  %v355 = vpop.f32.mrf.mxu0
  %v356 = vadd.f32 0.0, %v355
  %357 = vmatmul.f32.gmra.mxu0 %v321
  %v358 = vpop.f32.mrf.mxu0
  %v359 = vadd.f32 0.0, %v358
  %360 = vmatmul.f32.gmra.mxu0 %v324
  %v361 = vpop.f32.mrf.mxu0
  %v362 = vadd.f32 0.0, %v361
  %363 = vmatmul.f32.gmra.mxu0 %v327
  %v364 = vpop.f32.mrf.mxu0
  %v365 = vadd.f32 0.0, %v364
  %366 = vmatmul.f32.gmra.mxu0 %v330
  %v367 = vpop.f32.mrf.mxu0
  %v368 = vadd.f32 0.0, %v367
  %369 = vdwg.mxu0
  %370 = vmatpush.msra.mxu0 0.0
  %371 = vmatpush.msra.mxu0 0.0
  %372 = vmatpush.msra.mxu0 0.0
  %373 = vmatpush.msra.mxu0 0.0
  %374 = vmatpush.msra.mxu0 0.0
  %375 = vmatpush.msra.mxu0 0.0
  %376 = vmatpush.msra.mxu0 0.0
  %377 = vmatpush.msra.mxu0 0.0
  %378 = vmatpush.msra.mxu0 0.0
  %379 = vmatpush.msra.mxu0 %v281
  %380 = vmatpush.msra.mxu0 %v273
  %381 = vmatpush.msra.mxu0 %v265
  %382 = vmatpush.msra.mxu0 %v257
  %383 = vmatpush.msra.mxu0 %v249
  %384 = vmatpush.msra.mxu0 %v241
  %385 = vmatpush.msra.mxu0 %v233
  %386 = vmatmul.f32.gmra.mxu0 %v312
  %v387 = vpop.f32.mrf.mxu0
  %v388 = vadd.f32 0.0, %v387
  %389 = vmatmul.f32.gmra.mxu0 %v315
  %v390 = vpop.f32.mrf.mxu0
  %v391 = vadd.f32 0.0, %v390
  %392 = vmatmul.f32.gmra.mxu0 %v318
  %v393 = vpop.f32.mrf.mxu0
  %v394 = vadd.f32 0.0, %v393
  %395 = vmatmul.f32.gmra.mxu0 %v321
  %v396 = vpop.f32.mrf.mxu0
  %v397 = vadd.f32 0.0, %v396
  %398 = vmatmul.f32.gmra.mxu0 %v324
  %v399 = vpop.f32.mrf.mxu0
  %v400 = vadd.f32 0.0, %v399
  %401 = vmatmul.f32.gmra.mxu0 %v327
  %v402 = vpop.f32.mrf.mxu0
  %v403 = vadd.f32 0.0, %v402
  %404 = vmatmul.f32.gmra.mxu0 %v330
  %v405 = vpop.f32.mrf.mxu0
  %v406 = vadd.f32 0.0, %v405
  %407 = vdwg.mxu0
  %408 = vmatpush.msra.mxu0 0.0
  %409 = vmatpush.msra.mxu0 0.0
  %410 = vmatpush.msra.mxu0 0.0
  %411 = vmatpush.msra.mxu0 0.0
  %412 = vmatpush.msra.mxu0 0.0
  %413 = vmatpush.msra.mxu0 0.0
  %414 = vmatpush.msra.mxu0 0.0
  %415 = vmatpush.msra.mxu0 0.0
  %416 = vmatpush.msra.mxu0 0.0
  %417 = vmatpush.msra.mxu0 %v282
  %418 = vmatpush.msra.mxu0 %v274
  %419 = vmatpush.msra.mxu0 %v266
  %420 = vmatpush.msra.mxu0 %v258
  %421 = vmatpush.msra.mxu0 %v250
  %422 = vmatpush.msra.mxu0 %v242
  %423 = vmatpush.msra.mxu0 %v234
  %424 = vmatmul.f32.gmra.mxu0 %v312
  %v425 = vpop.f32.mrf.mxu0
  %v426 = vadd.f32 0.0, %v425
  %427 = vmatmul.f32.gmra.mxu0 %v315
  %v428 = vpop.f32.mrf.mxu0
  %v429 = vadd.f32 0.0, %v428
  %430 = vmatmul.f32.gmra.mxu0 %v318
  %v431 = vpop.f32.mrf.mxu0
  %v432 = vadd.f32 0.0, %v431
  %433 = vmatmul.f32.gmra.mxu0 %v321
  %v434 = vpop.f32.mrf.mxu0
  %v435 = vadd.f32 0.0, %v434
  %436 = vmatmul.f32.gmra.mxu0 %v324
  %v437 = vpop.f32.mrf.mxu0
  %v438 = vadd.f32 0.0, %v437
  %439 = vmatmul.f32.gmra.mxu0 %v327
  %v440 = vpop.f32.mrf.mxu0
  %v441 = vadd.f32 0.0, %v440
  %442 = vmatmul.f32.gmra.mxu0 %v330
  %v443 = vpop.f32.mrf.mxu0
  %v444 = vadd.f32 0.0, %v443
  %445 = vdwg.mxu0
  %446 = vmatpush.msra.mxu0 0.0
  %447 = vmatpush.msra.mxu0 0.0
  %448 = vmatpush.msra.mxu0 0.0
  %449 = vmatpush.msra.mxu0 0.0
  %450 = vmatpush.msra.mxu0 0.0
  %451 = vmatpush.msra.mxu0 0.0
  %452 = vmatpush.msra.mxu0 0.0
  %453 = vmatpush.msra.mxu0 0.0
  %454 = vmatpush.msra.mxu0 0.0
  %455 = vmatpush.msra.mxu0 %v283
  %456 = vmatpush.msra.mxu0 %v275
  %457 = vmatpush.msra.mxu0 %v267
  %458 = vmatpush.msra.mxu0 %v259
  %459 = vmatpush.msra.mxu0 %v251
  %460 = vmatpush.msra.mxu0 %v243
  %461 = vmatpush.msra.mxu0 %v235
  %462 = vmatmul.f32.gmra.mxu0 %v312
  %v463 = vpop.f32.mrf.mxu0
  %v464 = vadd.f32 0.0, %v463
  %465 = vmatmul.f32.gmra.mxu0 %v315
  %v466 = vpop.f32.mrf.mxu0
  %v467 = vadd.f32 0.0, %v466
  %468 = vmatmul.f32.gmra.mxu0 %v318
  %v469 = vpop.f32.mrf.mxu0
  %v470 = vadd.f32 0.0, %v469
  %471 = vmatmul.f32.gmra.mxu0 %v321
  %v472 = vpop.f32.mrf.mxu0
  %v473 = vadd.f32 0.0, %v472
  %474 = vmatmul.f32.gmra.mxu0 %v324
  %v475 = vpop.f32.mrf.mxu0
  %v476 = vadd.f32 0.0, %v475
  %477 = vmatmul.f32.gmra.mxu0 %v327
  %v478 = vpop.f32.mrf.mxu0
  %v479 = vadd.f32 0.0, %v478
  %480 = vmatmul.f32.gmra.mxu0 %v330
  %v481 = vpop.f32.mrf.mxu0
  %v482 = vadd.f32 0.0, %v481
  %483 = vdwg.mxu0
  %484 = vmatpush.msra.mxu0 0.0
  %485 = vmatpush.msra.mxu0 0.0
  %486 = vmatpush.msra.mxu0 0.0
  %487 = vmatpush.msra.mxu0 0.0
  %488 = vmatpush.msra.mxu0 0.0
  %489 = vmatpush.msra.mxu0 0.0
  %490 = vmatpush.msra.mxu0 0.0
  %491 = vmatpush.msra.mxu0 0.0
  %492 = vmatpush.msra.mxu0 0.0
  %493 = vmatpush.msra.mxu0 %v284
  %494 = vmatpush.msra.mxu0 %v276
  %495 = vmatpush.msra.mxu0 %v268
  %496 = vmatpush.msra.mxu0 %v260
  %497 = vmatpush.msra.mxu0 %v252
  %498 = vmatpush.msra.mxu0 %v244
  %499 = vmatpush.msra.mxu0 %v236
  %500 = vmatmul.f32.gmra.mxu0 %v312
  %v501 = vpop.f32.mrf.mxu0
  %v502 = vadd.f32 0.0, %v501
  %503 = vmatmul.f32.gmra.mxu0 %v315
  %v504 = vpop.f32.mrf.mxu0
  %v505 = vadd.f32 0.0, %v504
  %506 = vmatmul.f32.gmra.mxu0 %v318
  %v507 = vpop.f32.mrf.mxu0
  %v508 = vadd.f32 0.0, %v507
  %509 = vmatmul.f32.gmra.mxu0 %v321
  %v510 = vpop.f32.mrf.mxu0
  %v511 = vadd.f32 0.0, %v510
  %512 = vmatmul.f32.gmra.mxu0 %v324
  %v513 = vpop.f32.mrf.mxu0
  %v514 = vadd.f32 0.0, %v513
  %515 = vmatmul.f32.gmra.mxu0 %v327
  %v516 = vpop.f32.mrf.mxu0
  %v517 = vadd.f32 0.0, %v516
  %518 = vmatmul.f32.gmra.mxu0 %v330
  %v519 = vpop.f32.mrf.mxu0
  %v520 = vadd.f32 0.0, %v519
  %521 = vdwg.mxu0
  %522 = vmatpush.msra.mxu0 0.0
  %523 = vmatpush.msra.mxu0 0.0
  %524 = vmatpush.msra.mxu0 0.0
  %525 = vmatpush.msra.mxu0 0.0
  %526 = vmatpush.msra.mxu0 0.0
  %527 = vmatpush.msra.mxu0 0.0
  %528 = vmatpush.msra.mxu0 0.0
  %529 = vmatpush.msra.mxu0 0.0
  %530 = vmatpush.msra.mxu0 0.0
  %531 = vmatpush.msra.mxu0 %v285
  %532 = vmatpush.msra.mxu0 %v277
  %533 = vmatpush.msra.mxu0 %v269
  %534 = vmatpush.msra.mxu0 %v261
  %535 = vmatpush.msra.mxu0 %v253
  %536 = vmatpush.msra.mxu0 %v245
  %537 = vmatpush.msra.mxu0 %v237
  %538 = vmatmul.f32.gmra.mxu0 %v312
  %v539 = vpop.f32.mrf.mxu0
  %v540 = vadd.f32 0.0, %v539
  %541 = vmatmul.f32.gmra.mxu0 %v315
  %v542 = vpop.f32.mrf.mxu0
  %v543 = vadd.f32 0.0, %v542
  %544 = vmatmul.f32.gmra.mxu0 %v318
  %v545 = vpop.f32.mrf.mxu0
  %v546 = vadd.f32 0.0, %v545
  %547 = vmatmul.f32.gmra.mxu0 %v321
  %v548 = vpop.f32.mrf.mxu0
  %v549 = vadd.f32 0.0, %v548
  %550 = vmatmul.f32.gmra.mxu0 %v324
  %v551 = vpop.f32.mrf.mxu0
  %v552 = vadd.f32 0.0, %v551
  %553 = vmatmul.f32.gmra.mxu0 %v327
  %v554 = vpop.f32.mrf.mxu0
  %v555 = vadd.f32 0.0, %v554
  %556 = vmatmul.f32.gmra.mxu0 %v330
  %v557 = vpop.f32.mrf.mxu0
  %v558 = vadd.f32 0.0, %v557
  %559 = vdwg.mxu0
  %560 = vmatpush.msra.mxu0 0.0
  %561 = vmatpush.msra.mxu0 0.0
  %562 = vmatpush.msra.mxu0 0.0
  %563 = vmatpush.msra.mxu0 0.0
  %564 = vmatpush.msra.mxu0 0.0
  %565 = vmatpush.msra.mxu0 0.0
  %566 = vmatpush.msra.mxu0 0.0
  %567 = vmatpush.msra.mxu0 0.0
  %568 = vmatpush.msra.mxu0 0.0
  %569 = vmatpush.msra.mxu0 %v286
  %570 = vmatpush.msra.mxu0 %v278
  %571 = vmatpush.msra.mxu0 %v270
  %572 = vmatpush.msra.mxu0 %v262
  %573 = vmatpush.msra.mxu0 %v254
  %574 = vmatpush.msra.mxu0 %v246
  %575 = vmatpush.msra.mxu0 %v238
  %576 = vmatmul.f32.gmra.mxu0 %v312
  %v577 = vpop.f32.mrf.mxu0
  %v578 = vadd.f32 0.0, %v577
  %579 = vmatmul.f32.gmra.mxu0 %v315
  %v580 = vpop.f32.mrf.mxu0
  %v581 = vadd.f32 0.0, %v580
  %582 = vmatmul.f32.gmra.mxu0 %v318
  %v583 = vpop.f32.mrf.mxu0
  %v584 = vadd.f32 0.0, %v583
  %585 = vmatmul.f32.gmra.mxu0 %v321
  %v586 = vpop.f32.mrf.mxu0
  %v587 = vadd.f32 0.0, %v586
  %588 = vmatmul.f32.gmra.mxu0 %v324
  %v589 = vpop.f32.mrf.mxu0
  %v590 = vadd.f32 0.0, %v589
  %591 = vmatmul.f32.gmra.mxu0 %v327
  %v592 = vpop.f32.mrf.mxu0
  %v593 = vadd.f32 0.0, %v592
  %594 = vmatmul.f32.gmra.mxu0 %v330
  %v595 = vpop.f32.mrf.mxu0
  %v596 = vadd.f32 0.0, %v595
  %597 = vdwg.mxu0
  %598 = vmatpush.msra.mxu0 0.0
  %599 = vmatpush.msra.mxu0 0.0
  %600 = vmatpush.msra.mxu0 0.0
  %601 = vmatpush.msra.mxu0 0.0
  %602 = vmatpush.msra.mxu0 0.0
  %603 = vmatpush.msra.mxu0 0.0
  %604 = vmatpush.msra.mxu0 0.0
  %605 = vmatpush.msra.mxu0 0.0
  %606 = vmatpush.msra.mxu0 0.0
  %607 = vmatpush.msra.mxu0 %v287
  %608 = vmatpush.msra.mxu0 %v279
  %609 = vmatpush.msra.mxu0 %v271
  %610 = vmatpush.msra.mxu0 %v263
  %611 = vmatpush.msra.mxu0 %v255
  %612 = vmatpush.msra.mxu0 %v247
  %613 = vmatpush.msra.mxu0 %v239
  %614 = vmatmul.f32.gmra.mxu0 %v312
  %v615 = vpop.f32.mrf.mxu0
  %v616 = vadd.f32 0.0, %v615
  %617 = vmatmul.f32.gmra.mxu0 %v315
  %v618 = vpop.f32.mrf.mxu0
  %v619 = vadd.f32 0.0, %v618
  %620 = vmatmul.f32.gmra.mxu0 %v318
  %v621 = vpop.f32.mrf.mxu0
  %v622 = vadd.f32 0.0, %v621
  %623 = vmatmul.f32.gmra.mxu0 %v321
  %v624 = vpop.f32.mrf.mxu0
  %v625 = vadd.f32 0.0, %v624
  %626 = vmatmul.f32.gmra.mxu0 %v324
  %v627 = vpop.f32.mrf.mxu0
  %v628 = vadd.f32 0.0, %v627
  %629 = vmatmul.f32.gmra.mxu0 %v327
  %v630 = vpop.f32.mrf.mxu0
  %v631 = vadd.f32 0.0, %v630
  %632 = vmatmul.f32.gmra.mxu0 %v330
  %v633 = vpop.f32.mrf.mxu0
  %v634 = vadd.f32 0.0, %v633
  %635 = vdwg.mxu0
  %v636 = vmax.f32 %v350, 0.0
  %v637 = vmax.f32 %v388, 0.0
  %v638 = vmax.f32 %v426, 0.0
  %v639 = vmax.f32 %v464, 0.0
  %v640 = vmax.f32 %v502, 0.0
  %v641 = vmax.f32 %v540, 0.0
  %v642 = vmax.f32 %v578, 0.0
  %v643 = vmax.f32 %v616, 0.0
  %v644 = vmax.f32 %v353, 0.0
  %v645 = vmax.f32 %v391, 0.0
  %v646 = vmax.f32 %v429, 0.0
  %v647 = vmax.f32 %v467, 0.0
  %v648 = vmax.f32 %v505, 0.0
  %v649 = vmax.f32 %v543, 0.0
  %v650 = vmax.f32 %v581, 0.0
  %v651 = vmax.f32 %v619, 0.0
  %v652 = vmax.f32 %v356, 0.0
  %v653 = vmax.f32 %v394, 0.0
  %v654 = vmax.f32 %v432, 0.0
  %v655 = vmax.f32 %v470, 0.0
  %v656 = vmax.f32 %v508, 0.0
  %v657 = vmax.f32 %v546, 0.0
  %v658 = vmax.f32 %v584, 0.0
  %v659 = vmax.f32 %v622, 0.0
  %v660 = vmax.f32 %v359, 0.0
  %v661 = vmax.f32 %v397, 0.0
  %v662 = vmax.f32 %v435, 0.0
  %v663 = vmax.f32 %v473, 0.0
  %v664 = vmax.f32 %v511, 0.0
  %v665 = vmax.f32 %v549, 0.0
  %v666 = vmax.f32 %v587, 0.0
  %v667 = vmax.f32 %v625, 0.0
  %v668 = vmax.f32 %v362, 0.0
  %v669 = vmax.f32 %v400, 0.0
  %v670 = vmax.f32 %v438, 0.0
  %v671 = vmax.f32 %v476, 0.0
  %v672 = vmax.f32 %v514, 0.0
  %v673 = vmax.f32 %v552, 0.0
  %v674 = vmax.f32 %v590, 0.0
  %v675 = vmax.f32 %v628, 0.0
  %v676 = vmax.f32 %v365, 0.0
  %v677 = vmax.f32 %v403, 0.0
  %v678 = vmax.f32 %v441, 0.0
  %v679 = vmax.f32 %v479, 0.0
  %v680 = vmax.f32 %v517, 0.0
  %v681 = vmax.f32 %v555, 0.0
  %v682 = vmax.f32 %v593, 0.0
  %v683 = vmax.f32 %v631, 0.0
  %v684 = vmax.f32 %v368, 0.0
  %v685 = vmax.f32 %v406, 0.0
  %v686 = vmax.f32 %v444, 0.0
  %v687 = vmax.f32 %v482, 0.0
  %v688 = vmax.f32 %v520, 0.0
  %v689 = vmax.f32 %v558, 0.0
  %v690 = vmax.f32 %v596, 0.0
  %v691 = vmax.f32 %v634, 0.0
  %v693 = vsel %vm310, %v295, 0
  %v696 = vsel %vm310, %v296, 0
  %v699 = vsel %vm310, %v297, 0
  %v702 = vsel %vm310, %v298, 0
  %v705 = vsel %vm310, %v299, 0
  %v708 = vsel %vm310, %v300, 0
  %v711 = vsel %vm310, %v301, 0
  %713 = vmatpush.msra.mxu0 0.0
  %714 = vmatpush.msra.mxu0 0.0
  %715 = vmatpush.msra.mxu0 0.0
  %716 = vmatpush.msra.mxu0 0.0
  %717 = vmatpush.msra.mxu0 0.0
  %718 = vmatpush.msra.mxu0 0.0
  %719 = vmatpush.msra.mxu0 0.0
  %720 = vmatpush.msra.mxu0 0.0
  %721 = vmatpush.msra.mxu0 0.0
  %722 = vmatpush.msra.mxu0 %v684
  %723 = vmatpush.msra.mxu0 %v676
  %724 = vmatpush.msra.mxu0 %v668
  %725 = vmatpush.msra.mxu0 %v660
  %726 = vmatpush.msra.mxu0 %v652
  %727 = vmatpush.msra.mxu0 %v644
  %728 = vmatpush.msra.mxu0 %v636
  %729 = vmatmul.f32.gmra.mxu0 %v693
  %v730 = vpop.f32.mrf.mxu0
  %v731 = vadd.f32 0.0, %v730
  %732 = vmatmul.f32.gmra.mxu0 %v696
  %v733 = vpop.f32.mrf.mxu0
  %v734 = vadd.f32 0.0, %v733
  %735 = vmatmul.f32.gmra.mxu0 %v699
  %v736 = vpop.f32.mrf.mxu0
  %v737 = vadd.f32 0.0, %v736
  %738 = vmatmul.f32.gmra.mxu0 %v702
  %v739 = vpop.f32.mrf.mxu0
  %v740 = vadd.f32 0.0, %v739
  %741 = vmatmul.f32.gmra.mxu0 %v705
  %v742 = vpop.f32.mrf.mxu0
  %v743 = vadd.f32 0.0, %v742
  %744 = vmatmul.f32.gmra.mxu0 %v708
  %v745 = vpop.f32.mrf.mxu0
  %v746 = vadd.f32 0.0, %v745
  %747 = vmatmul.f32.gmra.mxu0 %v711
  %v748 = vpop.f32.mrf.mxu0
  %v749 = vadd.f32 0.0, %v748
  %750 = vdwg.mxu0
  %751 = vmatpush.msra.mxu0 0.0
  %752 = vmatpush.msra.mxu0 0.0
  %753 = vmatpush.msra.mxu0 0.0
  %754 = vmatpush.msra.mxu0 0.0
  %755 = vmatpush.msra.mxu0 0.0
  %756 = vmatpush.msra.mxu0 0.0
  %757 = vmatpush.msra.mxu0 0.0
  %758 = vmatpush.msra.mxu0 0.0
  %759 = vmatpush.msra.mxu0 0.0
  %760 = vmatpush.msra.mxu0 %v685
  %761 = vmatpush.msra.mxu0 %v677
  %762 = vmatpush.msra.mxu0 %v669
  %763 = vmatpush.msra.mxu0 %v661
  %764 = vmatpush.msra.mxu0 %v653
  %765 = vmatpush.msra.mxu0 %v645
  %766 = vmatpush.msra.mxu0 %v637
  %767 = vmatmul.f32.gmra.mxu0 %v693
  %v768 = vpop.f32.mrf.mxu0
  %v769 = vadd.f32 0.0, %v768
  %770 = vmatmul.f32.gmra.mxu0 %v696
  %v771 = vpop.f32.mrf.mxu0
  %v772 = vadd.f32 0.0, %v771
  %773 = vmatmul.f32.gmra.mxu0 %v699
  %v774 = vpop.f32.mrf.mxu0
  %v775 = vadd.f32 0.0, %v774
  %776 = vmatmul.f32.gmra.mxu0 %v702
  %v777 = vpop.f32.mrf.mxu0
  %v778 = vadd.f32 0.0, %v777
  %779 = vmatmul.f32.gmra.mxu0 %v705
  %v780 = vpop.f32.mrf.mxu0
  %v781 = vadd.f32 0.0, %v780
  %782 = vmatmul.f32.gmra.mxu0 %v708
  %v783 = vpop.f32.mrf.mxu0
  %v784 = vadd.f32 0.0, %v783
  %785 = vmatmul.f32.gmra.mxu0 %v711
  %v786 = vpop.f32.mrf.mxu0
  %v787 = vadd.f32 0.0, %v786
  %788 = vdwg.mxu0
  %789 = vmatpush.msra.mxu0 0.0
  %790 = vmatpush.msra.mxu0 0.0
  %791 = vmatpush.msra.mxu0 0.0
  %792 = vmatpush.msra.mxu0 0.0
  %793 = vmatpush.msra.mxu0 0.0
  %794 = vmatpush.msra.mxu0 0.0
  %795 = vmatpush.msra.mxu0 0.0
  %796 = vmatpush.msra.mxu0 0.0
  %797 = vmatpush.msra.mxu0 0.0
  %798 = vmatpush.msra.mxu0 %v686
  %799 = vmatpush.msra.mxu0 %v678
  %800 = vmatpush.msra.mxu0 %v670
  %801 = vmatpush.msra.mxu0 %v662
  %802 = vmatpush.msra.mxu0 %v654
  %803 = vmatpush.msra.mxu0 %v646
  %804 = vmatpush.msra.mxu0 %v638
  %805 = vmatmul.f32.gmra.mxu0 %v693
  %v806 = vpop.f32.mrf.mxu0
  %v807 = vadd.f32 0.0, %v806
  %808 = vmatmul.f32.gmra.mxu0 %v696
  %v809 = vpop.f32.mrf.mxu0
  %v810 = vadd.f32 0.0, %v809
  %811 = vmatmul.f32.gmra.mxu0 %v699
  %v812 = vpop.f32.mrf.mxu0
  %v813 = vadd.f32 0.0, %v812
  %814 = vmatmul.f32.gmra.mxu0 %v702
  %v815 = vpop.f32.mrf.mxu0
  %v816 = vadd.f32 0.0, %v815
  %817 = vmatmul.f32.gmra.mxu0 %v705
  %v818 = vpop.f32.mrf.mxu0
  %v819 = vadd.f32 0.0, %v818
  %820 = vmatmul.f32.gmra.mxu0 %v708
  %v821 = vpop.f32.mrf.mxu0
  %v822 = vadd.f32 0.0, %v821
  %823 = vmatmul.f32.gmra.mxu0 %v711
  %v824 = vpop.f32.mrf.mxu0
  %v825 = vadd.f32 0.0, %v824
  %826 = vdwg.mxu0
  %827 = vmatpush.msra.mxu0 0.0
  %828 = vmatpush.msra.mxu0 0.0
  %829 = vmatpush.msra.mxu0 0.0
  %830 = vmatpush.msra.mxu0 0.0
  %831 = vmatpush.msra.mxu0 0.0
  %832 = vmatpush.msra.mxu0 0.0
  %833 = vmatpush.msra.mxu0 0.0
  %834 = vmatpush.msra.mxu0 0.0
  %835 = vmatpush.msra.mxu0 0.0
  %836 = vmatpush.msra.mxu0 %v687
  %837 = vmatpush.msra.mxu0 %v679
  %838 = vmatpush.msra.mxu0 %v671
  %839 = vmatpush.msra.mxu0 %v663
  %840 = vmatpush.msra.mxu0 %v655
  %841 = vmatpush.msra.mxu0 %v647
  %842 = vmatpush.msra.mxu0 %v639
  %843 = vmatmul.f32.gmra.mxu0 %v693
  %v844 = vpop.f32.mrf.mxu0
  %v845 = vadd.f32 0.0, %v844
  %846 = vmatmul.f32.gmra.mxu0 %v696
  %v847 = vpop.f32.mrf.mxu0
  %v848 = vadd.f32 0.0, %v847
  %849 = vmatmul.f32.gmra.mxu0 %v699
  %v850 = vpop.f32.mrf.mxu0
  %v851 = vadd.f32 0.0, %v850
  %852 = vmatmul.f32.gmra.mxu0 %v702
  %v853 = vpop.f32.mrf.mxu0
  %v854 = vadd.f32 0.0, %v853
  %855 = vmatmul.f32.gmra.mxu0 %v705
  %v856 = vpop.f32.mrf.mxu0
  %v857 = vadd.f32 0.0, %v856
  %858 = vmatmul.f32.gmra.mxu0 %v708
  %v859 = vpop.f32.mrf.mxu0
  %v860 = vadd.f32 0.0, %v859
  %861 = vmatmul.f32.gmra.mxu0 %v711
  %v862 = vpop.f32.mrf.mxu0
  %v863 = vadd.f32 0.0, %v862
  %864 = vdwg.mxu0
  %865 = vmatpush.msra.mxu0 0.0
  %866 = vmatpush.msra.mxu0 0.0
  %867 = vmatpush.msra.mxu0 0.0
  %868 = vmatpush.msra.mxu0 0.0
  %869 = vmatpush.msra.mxu0 0.0
  %870 = vmatpush.msra.mxu0 0.0
  %871 = vmatpush.msra.mxu0 0.0
  %872 = vmatpush.msra.mxu0 0.0
  %873 = vmatpush.msra.mxu0 0.0
  %874 = vmatpush.msra.mxu0 %v688
  %875 = vmatpush.msra.mxu0 %v680
  %876 = vmatpush.msra.mxu0 %v672
  %877 = vmatpush.msra.mxu0 %v664
  %878 = vmatpush.msra.mxu0 %v656
  %879 = vmatpush.msra.mxu0 %v648
  %880 = vmatpush.msra.mxu0 %v640
  %881 = vmatmul.f32.gmra.mxu0 %v693
  %v882 = vpop.f32.mrf.mxu0
  %v883 = vadd.f32 0.0, %v882
  %884 = vmatmul.f32.gmra.mxu0 %v696
  %v885 = vpop.f32.mrf.mxu0
  %v886 = vadd.f32 0.0, %v885
  %887 = vmatmul.f32.gmra.mxu0 %v699
  %v888 = vpop.f32.mrf.mxu0
  %v889 = vadd.f32 0.0, %v888
  %890 = vmatmul.f32.gmra.mxu0 %v702
  %v891 = vpop.f32.mrf.mxu0
  %v892 = vadd.f32 0.0, %v891
  %893 = vmatmul.f32.gmra.mxu0 %v705
  %v894 = vpop.f32.mrf.mxu0
  %v895 = vadd.f32 0.0, %v894
  %896 = vmatmul.f32.gmra.mxu0 %v708
  %v897 = vpop.f32.mrf.mxu0
  %v898 = vadd.f32 0.0, %v897
  %899 = vmatmul.f32.gmra.mxu0 %v711
  %v900 = vpop.f32.mrf.mxu0
  %v901 = vadd.f32 0.0, %v900
  %902 = vdwg.mxu0
  %903 = vmatpush.msra.mxu0 0.0
  %904 = vmatpush.msra.mxu0 0.0
  %905 = vmatpush.msra.mxu0 0.0
  %906 = vmatpush.msra.mxu0 0.0
  %907 = vmatpush.msra.mxu0 0.0
  %908 = vmatpush.msra.mxu0 0.0
  %909 = vmatpush.msra.mxu0 0.0
  %910 = vmatpush.msra.mxu0 0.0
  %911 = vmatpush.msra.mxu0 0.0
  %912 = vmatpush.msra.mxu0 %v689
  %913 = vmatpush.msra.mxu0 %v681
  %914 = vmatpush.msra.mxu0 %v673
  %915 = vmatpush.msra.mxu0 %v665
  %916 = vmatpush.msra.mxu0 %v657
  %917 = vmatpush.msra.mxu0 %v649
  %918 = vmatpush.msra.mxu0 %v641
  %919 = vmatmul.f32.gmra.mxu0 %v693
  %v920 = vpop.f32.mrf.mxu0
  %v921 = vadd.f32 0.0, %v920
  %922 = vmatmul.f32.gmra.mxu0 %v696
  %v923 = vpop.f32.mrf.mxu0
  %v924 = vadd.f32 0.0, %v923
  %925 = vmatmul.f32.gmra.mxu0 %v699
  %v926 = vpop.f32.mrf.mxu0
  %v927 = vadd.f32 0.0, %v926
  %928 = vmatmul.f32.gmra.mxu0 %v702
  %v929 = vpop.f32.mrf.mxu0
  %v930 = vadd.f32 0.0, %v929
  %931 = vmatmul.f32.gmra.mxu0 %v705
  %v932 = vpop.f32.mrf.mxu0
  %v933 = vadd.f32 0.0, %v932
  %934 = vmatmul.f32.gmra.mxu0 %v708
  %v935 = vpop.f32.mrf.mxu0
  %v936 = vadd.f32 0.0, %v935
  %937 = vmatmul.f32.gmra.mxu0 %v711
  %v938 = vpop.f32.mrf.mxu0
  %v939 = vadd.f32 0.0, %v938
  %940 = vdwg.mxu0
  %941 = vmatpush.msra.mxu0 0.0
  %942 = vmatpush.msra.mxu0 0.0
  %943 = vmatpush.msra.mxu0 0.0
  %944 = vmatpush.msra.mxu0 0.0
  %945 = vmatpush.msra.mxu0 0.0
  %946 = vmatpush.msra.mxu0 0.0
  %947 = vmatpush.msra.mxu0 0.0
  %948 = vmatpush.msra.mxu0 0.0
  %949 = vmatpush.msra.mxu0 0.0
  %950 = vmatpush.msra.mxu0 %v690
  %951 = vmatpush.msra.mxu0 %v682
  %952 = vmatpush.msra.mxu0 %v674
  %953 = vmatpush.msra.mxu0 %v666
  %954 = vmatpush.msra.mxu0 %v658
  %955 = vmatpush.msra.mxu0 %v650
  %956 = vmatpush.msra.mxu0 %v642
  %957 = vmatmul.f32.gmra.mxu0 %v693
  %v958 = vpop.f32.mrf.mxu0
  %v959 = vadd.f32 0.0, %v958
  %960 = vmatmul.f32.gmra.mxu0 %v696
  %v961 = vpop.f32.mrf.mxu0
  %v962 = vadd.f32 0.0, %v961
  %963 = vmatmul.f32.gmra.mxu0 %v699
  %v964 = vpop.f32.mrf.mxu0
  %v965 = vadd.f32 0.0, %v964
  %966 = vmatmul.f32.gmra.mxu0 %v702
  %v967 = vpop.f32.mrf.mxu0
  %v968 = vadd.f32 0.0, %v967
  %969 = vmatmul.f32.gmra.mxu0 %v705
  %v970 = vpop.f32.mrf.mxu0
  %v971 = vadd.f32 0.0, %v970
  %972 = vmatmul.f32.gmra.mxu0 %v708
  %v973 = vpop.f32.mrf.mxu0
  %v974 = vadd.f32 0.0, %v973
  %975 = vmatmul.f32.gmra.mxu0 %v711
  %v976 = vpop.f32.mrf.mxu0
  %v977 = vadd.f32 0.0, %v976
  %978 = vdwg.mxu0
  %979 = vmatpush.msra.mxu0 0.0
  %980 = vmatpush.msra.mxu0 0.0
  %981 = vmatpush.msra.mxu0 0.0
  %982 = vmatpush.msra.mxu0 0.0
  %983 = vmatpush.msra.mxu0 0.0
  %984 = vmatpush.msra.mxu0 0.0
  %985 = vmatpush.msra.mxu0 0.0
  %986 = vmatpush.msra.mxu0 0.0
  %987 = vmatpush.msra.mxu0 0.0
  %988 = vmatpush.msra.mxu0 %v691
  %989 = vmatpush.msra.mxu0 %v683
  %990 = vmatpush.msra.mxu0 %v675
  %991 = vmatpush.msra.mxu0 %v667
  %992 = vmatpush.msra.mxu0 %v659
  %993 = vmatpush.msra.mxu0 %v651
  %994 = vmatpush.msra.mxu0 %v643
  %995 = vmatmul.f32.gmra.mxu0 %v693
  %v996 = vpop.f32.mrf.mxu0
  %v997 = vadd.f32 0.0, %v996
  %998 = vmatmul.f32.gmra.mxu0 %v696
  %v999 = vpop.f32.mrf.mxu0
  %v1000 = vadd.f32 0.0, %v999
  %1001 = vmatmul.f32.gmra.mxu0 %v699
  %v1002 = vpop.f32.mrf.mxu0
  %v1003 = vadd.f32 0.0, %v1002
  %1004 = vmatmul.f32.gmra.mxu0 %v702
  %v1005 = vpop.f32.mrf.mxu0
  %v1006 = vadd.f32 0.0, %v1005
  %1007 = vmatmul.f32.gmra.mxu0 %v705
  %v1008 = vpop.f32.mrf.mxu0
  %v1009 = vadd.f32 0.0, %v1008
  %1010 = vmatmul.f32.gmra.mxu0 %v708
  %v1011 = vpop.f32.mrf.mxu0
  %v1012 = vadd.f32 0.0, %v1011
  %1013 = vmatmul.f32.gmra.mxu0 %v711
  %v1014 = vpop.f32.mrf.mxu0
  %v1015 = vadd.f32 0.0, %v1014
  %1016 = vdwg.mxu0
  %v1017 = vmax.f32 %v731, 0.0
  %v1018 = vmax.f32 %v769, 0.0
  %v1019 = vmax.f32 %v807, 0.0
  %v1020 = vmax.f32 %v845, 0.0
  %v1021 = vmax.f32 %v883, 0.0
  %v1022 = vmax.f32 %v921, 0.0
  %v1023 = vmax.f32 %v959, 0.0
  %v1024 = vmax.f32 %v997, 0.0
  %v1025 = vmax.f32 %v734, 0.0
  %v1026 = vmax.f32 %v772, 0.0
  %v1027 = vmax.f32 %v810, 0.0
  %v1028 = vmax.f32 %v848, 0.0
  %v1029 = vmax.f32 %v886, 0.0
  %v1030 = vmax.f32 %v924, 0.0
  %v1031 = vmax.f32 %v962, 0.0
  %v1032 = vmax.f32 %v1000, 0.0
  %v1033 = vmax.f32 %v737, 0.0
  %v1034 = vmax.f32 %v775, 0.0
  %v1035 = vmax.f32 %v813, 0.0
  %v1036 = vmax.f32 %v851, 0.0
  %v1037 = vmax.f32 %v889, 0.0
  %v1038 = vmax.f32 %v927, 0.0
  %v1039 = vmax.f32 %v965, 0.0
  %v1040 = vmax.f32 %v1003, 0.0
  %v1041 = vmax.f32 %v740, 0.0
  %v1042 = vmax.f32 %v778, 0.0
  %v1043 = vmax.f32 %v816, 0.0
  %v1044 = vmax.f32 %v854, 0.0
  %v1045 = vmax.f32 %v892, 0.0
  %v1046 = vmax.f32 %v930, 0.0
  %v1047 = vmax.f32 %v968, 0.0
  %v1048 = vmax.f32 %v1006, 0.0
  %v1049 = vmax.f32 %v743, 0.0
  %v1050 = vmax.f32 %v781, 0.0
  %v1051 = vmax.f32 %v819, 0.0
  %v1052 = vmax.f32 %v857, 0.0
  %v1053 = vmax.f32 %v895, 0.0
  %v1054 = vmax.f32 %v933, 0.0
  %v1055 = vmax.f32 %v971, 0.0
  %v1056 = vmax.f32 %v1009, 0.0
  %v1057 = vmax.f32 %v746, 0.0
  %v1058 = vmax.f32 %v784, 0.0
  %v1059 = vmax.f32 %v822, 0.0
  %v1060 = vmax.f32 %v860, 0.0
  %v1061 = vmax.f32 %v898, 0.0
  %v1062 = vmax.f32 %v936, 0.0
  %v1063 = vmax.f32 %v974, 0.0
  %v1064 = vmax.f32 %v1012, 0.0
  %v1065 = vmax.f32 %v749, 0.0
  %v1066 = vmax.f32 %v787, 0.0
  %v1067 = vmax.f32 %v825, 0.0
  %v1068 = vmax.f32 %v863, 0.0
  %v1069 = vmax.f32 %v901, 0.0
  %v1070 = vmax.f32 %v939, 0.0
  %v1071 = vmax.f32 %v977, 0.0
  %v1072 = vmax.f32 %v1015, 0.0
  %v1074 = vsel %vm310, %v302, 0
  %v1077 = vsel %vm310, %v303, 0
  %v1080 = vsel %vm310, %v304, 0
  %v1083 = vsel %vm310, %v305, 0
  %v1086 = vsel %vm310, %v306, 0
  %v1089 = vsel %vm310, %v307, 0
  %v1092 = vsel %vm310, %v308, 0
  %1094 = vmatpush.msra.mxu0 0.0
  %1095 = vmatpush.msra.mxu0 0.0
  %1096 = vmatpush.msra.mxu0 0.0
  %1097 = vmatpush.msra.mxu0 0.0
  %1098 = vmatpush.msra.mxu0 0.0
  %1099 = vmatpush.msra.mxu0 0.0
  %1100 = vmatpush.msra.mxu0 0.0
  %1101 = vmatpush.msra.mxu0 0.0
  %1102 = vmatpush.msra.mxu0 0.0
  %1103 = vmatpush.msra.mxu0 %v1065
  %1104 = vmatpush.msra.mxu0 %v1057
  %1105 = vmatpush.msra.mxu0 %v1049
  %1106 = vmatpush.msra.mxu0 %v1041
  %1107 = vmatpush.msra.mxu0 %v1033
  %1108 = vmatpush.msra.mxu0 %v1025
  %1109 = vmatpush.msra.mxu0 %v1017
  %1110 = vmatmul.f32.gmra.mxu0 %v1074
  %v1111 = vpop.f32.mrf.mxu0
  %v1112 = vadd.f32 0.0, %v1111
  %1113 = vmatmul.f32.gmra.mxu0 %v1077
  %v1114 = vpop.f32.mrf.mxu0
  %v1115 = vadd.f32 0.0, %v1114
  %1116 = vmatmul.f32.gmra.mxu0 %v1080
  %v1117 = vpop.f32.mrf.mxu0
  %v1118 = vadd.f32 0.0, %v1117
  %1119 = vmatmul.f32.gmra.mxu0 %v1083
  %v1120 = vpop.f32.mrf.mxu0
  %v1121 = vadd.f32 0.0, %v1120
  %1122 = vmatmul.f32.gmra.mxu0 %v1086
  %v1123 = vpop.f32.mrf.mxu0
  %v1124 = vadd.f32 0.0, %v1123
  %1125 = vmatmul.f32.gmra.mxu0 %v1089
  %v1126 = vpop.f32.mrf.mxu0
  %v1127 = vadd.f32 0.0, %v1126
  %1128 = vmatmul.f32.gmra.mxu0 %v1092
  %v1129 = vpop.f32.mrf.mxu0
  %v1130 = vadd.f32 0.0, %v1129
  %1131 = vdwg.mxu0
  %1132 = vmatpush.msra.mxu0 0.0
  %1133 = vmatpush.msra.mxu0 0.0
  %1134 = vmatpush.msra.mxu0 0.0
  %1135 = vmatpush.msra.mxu0 0.0
  %1136 = vmatpush.msra.mxu0 0.0
  %1137 = vmatpush.msra.mxu0 0.0
  %1138 = vmatpush.msra.mxu0 0.0
  %1139 = vmatpush.msra.mxu0 0.0
  %1140 = vmatpush.msra.mxu0 0.0
  %1141 = vmatpush.msra.mxu0 %v1066
  %1142 = vmatpush.msra.mxu0 %v1058
  %1143 = vmatpush.msra.mxu0 %v1050
  %1144 = vmatpush.msra.mxu0 %v1042
  %1145 = vmatpush.msra.mxu0 %v1034
  %1146 = vmatpush.msra.mxu0 %v1026
  %1147 = vmatpush.msra.mxu0 %v1018
  %1148 = vmatmul.f32.gmra.mxu0 %v1074
  %v1149 = vpop.f32.mrf.mxu0
  %v1150 = vadd.f32 0.0, %v1149
  %1151 = vmatmul.f32.gmra.mxu0 %v1077
  %v1152 = vpop.f32.mrf.mxu0
  %v1153 = vadd.f32 0.0, %v1152
  %1154 = vmatmul.f32.gmra.mxu0 %v1080
  %v1155 = vpop.f32.mrf.mxu0
  %v1156 = vadd.f32 0.0, %v1155
  %1157 = vmatmul.f32.gmra.mxu0 %v1083
  %v1158 = vpop.f32.mrf.mxu0
  %v1159 = vadd.f32 0.0, %v1158
  %1160 = vmatmul.f32.gmra.mxu0 %v1086
  %v1161 = vpop.f32.mrf.mxu0
  %v1162 = vadd.f32 0.0, %v1161
  %1163 = vmatmul.f32.gmra.mxu0 %v1089
  %v1164 = vpop.f32.mrf.mxu0
  %v1165 = vadd.f32 0.0, %v1164
  %1166 = vmatmul.f32.gmra.mxu0 %v1092
  %v1167 = vpop.f32.mrf.mxu0
  %v1168 = vadd.f32 0.0, %v1167
  %1169 = vdwg.mxu0
  %1170 = vmatpush.msra.mxu0 0.0
  %1171 = vmatpush.msra.mxu0 0.0
  %1172 = vmatpush.msra.mxu0 0.0
  %1173 = vmatpush.msra.mxu0 0.0
  %1174 = vmatpush.msra.mxu0 0.0
  %1175 = vmatpush.msra.mxu0 0.0
  %1176 = vmatpush.msra.mxu0 0.0
  %1177 = vmatpush.msra.mxu0 0.0
  %1178 = vmatpush.msra.mxu0 0.0
  %1179 = vmatpush.msra.mxu0 %v1067
  %1180 = vmatpush.msra.mxu0 %v1059
  %1181 = vmatpush.msra.mxu0 %v1051
  %1182 = vmatpush.msra.mxu0 %v1043
  %1183 = vmatpush.msra.mxu0 %v1035
  %1184 = vmatpush.msra.mxu0 %v1027
  %1185 = vmatpush.msra.mxu0 %v1019
  %1186 = vmatmul.f32.gmra.mxu0 %v1074
  %v1187 = vpop.f32.mrf.mxu0
  %v1188 = vadd.f32 0.0, %v1187
  %1189 = vmatmul.f32.gmra.mxu0 %v1077
  %v1190 = vpop.f32.mrf.mxu0
  %v1191 = vadd.f32 0.0, %v1190
  %1192 = vmatmul.f32.gmra.mxu0 %v1080
  %v1193 = vpop.f32.mrf.mxu0
  %v1194 = vadd.f32 0.0, %v1193
  %1195 = vmatmul.f32.gmra.mxu0 %v1083
  %v1196 = vpop.f32.mrf.mxu0
  %v1197 = vadd.f32 0.0, %v1196
  %1198 = vmatmul.f32.gmra.mxu0 %v1086
  %v1199 = vpop.f32.mrf.mxu0
  %v1200 = vadd.f32 0.0, %v1199
  %1201 = vmatmul.f32.gmra.mxu0 %v1089
  %v1202 = vpop.f32.mrf.mxu0
  %v1203 = vadd.f32 0.0, %v1202
  %1204 = vmatmul.f32.gmra.mxu0 %v1092
  %v1205 = vpop.f32.mrf.mxu0
  %v1206 = vadd.f32 0.0, %v1205
  %1207 = vdwg.mxu0
  %1208 = vmatpush.msra.mxu0 0.0
  %1209 = vmatpush.msra.mxu0 0.0
  %1210 = vmatpush.msra.mxu0 0.0
  %1211 = vmatpush.msra.mxu0 0.0
  %1212 = vmatpush.msra.mxu0 0.0
  %1213 = vmatpush.msra.mxu0 0.0
  %1214 = vmatpush.msra.mxu0 0.0
  %1215 = vmatpush.msra.mxu0 0.0
  %1216 = vmatpush.msra.mxu0 0.0
  %1217 = vmatpush.msra.mxu0 %v1068
  %1218 = vmatpush.msra.mxu0 %v1060
  %1219 = vmatpush.msra.mxu0 %v1052
  %1220 = vmatpush.msra.mxu0 %v1044
  %1221 = vmatpush.msra.mxu0 %v1036
  %1222 = vmatpush.msra.mxu0 %v1028
  %1223 = vmatpush.msra.mxu0 %v1020
  %1224 = vmatmul.f32.gmra.mxu0 %v1074
  %v1225 = vpop.f32.mrf.mxu0
  %v1226 = vadd.f32 0.0, %v1225
  %1227 = vmatmul.f32.gmra.mxu0 %v1077
  %v1228 = vpop.f32.mrf.mxu0
  %v1229 = vadd.f32 0.0, %v1228
  %1230 = vmatmul.f32.gmra.mxu0 %v1080
  %v1231 = vpop.f32.mrf.mxu0
  %v1232 = vadd.f32 0.0, %v1231
  %1233 = vmatmul.f32.gmra.mxu0 %v1083
  %v1234 = vpop.f32.mrf.mxu0
  %v1235 = vadd.f32 0.0, %v1234
  %1236 = vmatmul.f32.gmra.mxu0 %v1086
  %v1237 = vpop.f32.mrf.mxu0
  %v1238 = vadd.f32 0.0, %v1237
  %1239 = vmatmul.f32.gmra.mxu0 %v1089
  %v1240 = vpop.f32.mrf.mxu0
  %v1241 = vadd.f32 0.0, %v1240
  %1242 = vmatmul.f32.gmra.mxu0 %v1092
  %v1243 = vpop.f32.mrf.mxu0
  %v1244 = vadd.f32 0.0, %v1243
  %1245 = vdwg.mxu0
  %1246 = vmatpush.msra.mxu0 0.0
  %1247 = vmatpush.msra.mxu0 0.0
  %1248 = vmatpush.msra.mxu0 0.0
  %1249 = vmatpush.msra.mxu0 0.0
  %1250 = vmatpush.msra.mxu0 0.0
  %1251 = vmatpush.msra.mxu0 0.0
  %1252 = vmatpush.msra.mxu0 0.0
  %1253 = vmatpush.msra.mxu0 0.0
  %1254 = vmatpush.msra.mxu0 0.0
  %1255 = vmatpush.msra.mxu0 %v1069
  %1256 = vmatpush.msra.mxu0 %v1061
  %1257 = vmatpush.msra.mxu0 %v1053
  %1258 = vmatpush.msra.mxu0 %v1045
  %1259 = vmatpush.msra.mxu0 %v1037
  %1260 = vmatpush.msra.mxu0 %v1029
  %1261 = vmatpush.msra.mxu0 %v1021
  %1262 = vmatmul.f32.gmra.mxu0 %v1074
  %v1263 = vpop.f32.mrf.mxu0
  %v1264 = vadd.f32 0.0, %v1263
  %1265 = vmatmul.f32.gmra.mxu0 %v1077
  %v1266 = vpop.f32.mrf.mxu0
  %v1267 = vadd.f32 0.0, %v1266
  %1268 = vmatmul.f32.gmra.mxu0 %v1080
  %v1269 = vpop.f32.mrf.mxu0
  %v1270 = vadd.f32 0.0, %v1269
  %1271 = vmatmul.f32.gmra.mxu0 %v1083
  %v1272 = vpop.f32.mrf.mxu0
  %v1273 = vadd.f32 0.0, %v1272
  %1274 = vmatmul.f32.gmra.mxu0 %v1086
  %v1275 = vpop.f32.mrf.mxu0
  %v1276 = vadd.f32 0.0, %v1275
  %1277 = vmatmul.f32.gmra.mxu0 %v1089
  %v1278 = vpop.f32.mrf.mxu0
  %v1279 = vadd.f32 0.0, %v1278
  %1280 = vmatmul.f32.gmra.mxu0 %v1092
  %v1281 = vpop.f32.mrf.mxu0
  %v1282 = vadd.f32 0.0, %v1281
  %1283 = vdwg.mxu0
  %1284 = vmatpush.msra.mxu0 0.0
  %1285 = vmatpush.msra.mxu0 0.0
  %1286 = vmatpush.msra.mxu0 0.0
  %1287 = vmatpush.msra.mxu0 0.0
  %1288 = vmatpush.msra.mxu0 0.0
  %1289 = vmatpush.msra.mxu0 0.0
  %1290 = vmatpush.msra.mxu0 0.0
  %1291 = vmatpush.msra.mxu0 0.0
  %1292 = vmatpush.msra.mxu0 0.0
  %1293 = vmatpush.msra.mxu0 %v1070
  %1294 = vmatpush.msra.mxu0 %v1062
  %1295 = vmatpush.msra.mxu0 %v1054
  %1296 = vmatpush.msra.mxu0 %v1046
  %1297 = vmatpush.msra.mxu0 %v1038
  %1298 = vmatpush.msra.mxu0 %v1030
  %1299 = vmatpush.msra.mxu0 %v1022
  %1300 = vmatmul.f32.gmra.mxu0 %v1074
  %v1301 = vpop.f32.mrf.mxu0
  %v1302 = vadd.f32 0.0, %v1301
  %1303 = vmatmul.f32.gmra.mxu0 %v1077
  %v1304 = vpop.f32.mrf.mxu0
  %v1305 = vadd.f32 0.0, %v1304
  %1306 = vmatmul.f32.gmra.mxu0 %v1080
  %v1307 = vpop.f32.mrf.mxu0
  %v1308 = vadd.f32 0.0, %v1307
  %1309 = vmatmul.f32.gmra.mxu0 %v1083
  %v1310 = vpop.f32.mrf.mxu0
  %v1311 = vadd.f32 0.0, %v1310
  %1312 = vmatmul.f32.gmra.mxu0 %v1086
  %v1313 = vpop.f32.mrf.mxu0
  %v1314 = vadd.f32 0.0, %v1313
  %1315 = vmatmul.f32.gmra.mxu0 %v1089
  %v1316 = vpop.f32.mrf.mxu0
  %v1317 = vadd.f32 0.0, %v1316
  %1318 = vmatmul.f32.gmra.mxu0 %v1092
  %v1319 = vpop.f32.mrf.mxu0
  %v1320 = vadd.f32 0.0, %v1319
  %1321 = vdwg.mxu0
  %1322 = vmatpush.msra.mxu0 0.0
  %1323 = vmatpush.msra.mxu0 0.0
  %1324 = vmatpush.msra.mxu0 0.0
  %1325 = vmatpush.msra.mxu0 0.0
  %1326 = vmatpush.msra.mxu0 0.0
  %1327 = vmatpush.msra.mxu0 0.0
  %1328 = vmatpush.msra.mxu0 0.0
  %1329 = vmatpush.msra.mxu0 0.0
  %1330 = vmatpush.msra.mxu0 0.0
  %1331 = vmatpush.msra.mxu0 %v1071
  %1332 = vmatpush.msra.mxu0 %v1063
  %1333 = vmatpush.msra.mxu0 %v1055
  %1334 = vmatpush.msra.mxu0 %v1047
  %1335 = vmatpush.msra.mxu0 %v1039
  %1336 = vmatpush.msra.mxu0 %v1031
  %1337 = vmatpush.msra.mxu0 %v1023
  %1338 = vmatmul.f32.gmra.mxu0 %v1074
  %v1339 = vpop.f32.mrf.mxu0
  %v1340 = vadd.f32 0.0, %v1339
  %1341 = vmatmul.f32.gmra.mxu0 %v1077
  %v1342 = vpop.f32.mrf.mxu0
  %v1343 = vadd.f32 0.0, %v1342
  %1344 = vmatmul.f32.gmra.mxu0 %v1080
  %v1345 = vpop.f32.mrf.mxu0
  %v1346 = vadd.f32 0.0, %v1345
  %1347 = vmatmul.f32.gmra.mxu0 %v1083
  %v1348 = vpop.f32.mrf.mxu0
  %v1349 = vadd.f32 0.0, %v1348
  %1350 = vmatmul.f32.gmra.mxu0 %v1086
  %v1351 = vpop.f32.mrf.mxu0
  %v1352 = vadd.f32 0.0, %v1351
  %1353 = vmatmul.f32.gmra.mxu0 %v1089
  %v1354 = vpop.f32.mrf.mxu0
  %v1355 = vadd.f32 0.0, %v1354
  %1356 = vmatmul.f32.gmra.mxu0 %v1092
  %v1357 = vpop.f32.mrf.mxu0
  %v1358 = vadd.f32 0.0, %v1357
  %1359 = vdwg.mxu0
  %1360 = vmatpush.msra.mxu0 0.0
  %1361 = vmatpush.msra.mxu0 0.0
  %1362 = vmatpush.msra.mxu0 0.0
  %1363 = vmatpush.msra.mxu0 0.0
  %1364 = vmatpush.msra.mxu0 0.0
  %1365 = vmatpush.msra.mxu0 0.0
  %1366 = vmatpush.msra.mxu0 0.0
  %1367 = vmatpush.msra.mxu0 0.0
  %1368 = vmatpush.msra.mxu0 0.0
  %1369 = vmatpush.msra.mxu0 %v1072
  %1370 = vmatpush.msra.mxu0 %v1064
  %1371 = vmatpush.msra.mxu0 %v1056
  %1372 = vmatpush.msra.mxu0 %v1048
  %1373 = vmatpush.msra.mxu0 %v1040
  %1374 = vmatpush.msra.mxu0 %v1032
  %1375 = vmatpush.msra.mxu0 %v1024
  %1376 = vmatmul.f32.gmra.mxu0 %v1074
  %v1377 = vpop.f32.mrf.mxu0
  %v1378 = vadd.f32 0.0, %v1377
  %1379 = vmatmul.f32.gmra.mxu0 %v1077
  %v1380 = vpop.f32.mrf.mxu0
  %v1381 = vadd.f32 0.0, %v1380
  %1382 = vmatmul.f32.gmra.mxu0 %v1080
  %v1383 = vpop.f32.mrf.mxu0
  %v1384 = vadd.f32 0.0, %v1383
  %1385 = vmatmul.f32.gmra.mxu0 %v1083
  %v1386 = vpop.f32.mrf.mxu0
  %v1387 = vadd.f32 0.0, %v1386
  %1388 = vmatmul.f32.gmra.mxu0 %v1086
  %v1389 = vpop.f32.mrf.mxu0
  %v1390 = vadd.f32 0.0, %v1389
  %1391 = vmatmul.f32.gmra.mxu0 %v1089
  %v1392 = vpop.f32.mrf.mxu0
  %v1393 = vadd.f32 0.0, %v1392
  %1394 = vmatmul.f32.gmra.mxu0 %v1092
  %v1395 = vpop.f32.mrf.mxu0
  %v1396 = vadd.f32 0.0, %v1395
  %1397 = vdwg.mxu0
  %v1398 = vmax.f32 %v1112, 0.0
  %v1399 = vmax.f32 %v1150, 0.0
  %v1400 = vmax.f32 %v1188, 0.0
  %v1401 = vmax.f32 %v1226, 0.0
  %v1402 = vmax.f32 %v1264, 0.0
  %v1403 = vmax.f32 %v1302, 0.0
  %v1404 = vmax.f32 %v1340, 0.0
  %v1405 = vmax.f32 %v1378, 0.0
  %v1406 = vmax.f32 %v1115, 0.0
  %v1407 = vmax.f32 %v1153, 0.0
  %v1408 = vmax.f32 %v1191, 0.0
  %v1409 = vmax.f32 %v1229, 0.0
  %v1410 = vmax.f32 %v1267, 0.0
  %v1411 = vmax.f32 %v1305, 0.0
  %v1412 = vmax.f32 %v1343, 0.0
  %v1413 = vmax.f32 %v1381, 0.0
  %v1414 = vmax.f32 %v1118, 0.0
  %v1415 = vmax.f32 %v1156, 0.0
  %v1416 = vmax.f32 %v1194, 0.0
  %v1417 = vmax.f32 %v1232, 0.0
  %v1418 = vmax.f32 %v1270, 0.0
  %v1419 = vmax.f32 %v1308, 0.0
  %v1420 = vmax.f32 %v1346, 0.0
  %v1421 = vmax.f32 %v1384, 0.0
  %v1422 = vmax.f32 %v1121, 0.0
  %v1423 = vmax.f32 %v1159, 0.0
  %v1424 = vmax.f32 %v1197, 0.0
  %v1425 = vmax.f32 %v1235, 0.0
  %v1426 = vmax.f32 %v1273, 0.0
  %v1427 = vmax.f32 %v1311, 0.0
  %v1428 = vmax.f32 %v1349, 0.0
  %v1429 = vmax.f32 %v1387, 0.0
  %v1430 = vmax.f32 %v1124, 0.0
  %v1431 = vmax.f32 %v1162, 0.0
  %v1432 = vmax.f32 %v1200, 0.0
  %v1433 = vmax.f32 %v1238, 0.0
  %v1434 = vmax.f32 %v1276, 0.0
  %v1435 = vmax.f32 %v1314, 0.0
  %v1436 = vmax.f32 %v1352, 0.0
  %v1437 = vmax.f32 %v1390, 0.0
  %v1438 = vmax.f32 %v1127, 0.0
  %v1439 = vmax.f32 %v1165, 0.0
  %v1440 = vmax.f32 %v1203, 0.0
  %v1441 = vmax.f32 %v1241, 0.0
  %v1442 = vmax.f32 %v1279, 0.0
  %v1443 = vmax.f32 %v1317, 0.0
  %v1444 = vmax.f32 %v1355, 0.0
  %v1445 = vmax.f32 %v1393, 0.0
  %v1446 = vmax.f32 %v1130, 0.0
  %v1447 = vmax.f32 %v1168, 0.0
  %v1448 = vmax.f32 %v1206, 0.0
  %v1449 = vmax.f32 %v1244, 0.0
  %v1450 = vmax.f32 %v1282, 0.0
  %v1451 = vmax.f32 %v1320, 0.0
  %v1452 = vmax.f32 %v1358, 0.0
  %v1453 = vmax.f32 %v1396, 0.0
  %v1455 = vsel %vm310, %v309, 0
  %1457 = vmatpush.msra.mxu0 0.0
  %1458 = vmatpush.msra.mxu0 0.0
  %1459 = vmatpush.msra.mxu0 0.0
  %1460 = vmatpush.msra.mxu0 0.0
  %1461 = vmatpush.msra.mxu0 0.0
  %1462 = vmatpush.msra.mxu0 0.0
  %1463 = vmatpush.msra.mxu0 0.0
  %1464 = vmatpush.msra.mxu0 0.0
  %1465 = vmatpush.msra.mxu0 0.0
  %1466 = vmatpush.msra.mxu0 %v1446
  %1467 = vmatpush.msra.mxu0 %v1438
  %1468 = vmatpush.msra.mxu0 %v1430
  %1469 = vmatpush.msra.mxu0 %v1422
  %1470 = vmatpush.msra.mxu0 %v1414
  %1471 = vmatpush.msra.mxu0 %v1406
  %1472 = vmatpush.msra.mxu0 %v1398
  %1473 = vmatmul.f32.gmra.mxu0 %v1455
  %v1474 = vpop.f32.mrf.mxu0
  %v1475 = vadd.f32 0.0, %v1474
  %1476 = vdwg.mxu0
  %1477 = vmatpush.msra.mxu0 0.0
  %1478 = vmatpush.msra.mxu0 0.0
  %1479 = vmatpush.msra.mxu0 0.0
  %1480 = vmatpush.msra.mxu0 0.0
  %1481 = vmatpush.msra.mxu0 0.0
  %1482 = vmatpush.msra.mxu0 0.0
  %1483 = vmatpush.msra.mxu0 0.0
  %1484 = vmatpush.msra.mxu0 0.0
  %1485 = vmatpush.msra.mxu0 0.0
  %1486 = vmatpush.msra.mxu0 %v1447
  %1487 = vmatpush.msra.mxu0 %v1439
  %1488 = vmatpush.msra.mxu0 %v1431
  %1489 = vmatpush.msra.mxu0 %v1423
  %1490 = vmatpush.msra.mxu0 %v1415
  %1491 = vmatpush.msra.mxu0 %v1407
  %1492 = vmatpush.msra.mxu0 %v1399
  %1493 = vmatmul.f32.gmra.mxu0 %v1455
  %v1494 = vpop.f32.mrf.mxu0
  %v1495 = vadd.f32 0.0, %v1494
  %1496 = vdwg.mxu0
  %1497 = vmatpush.msra.mxu0 0.0
  %1498 = vmatpush.msra.mxu0 0.0
  %1499 = vmatpush.msra.mxu0 0.0
  %1500 = vmatpush.msra.mxu0 0.0
  %1501 = vmatpush.msra.mxu0 0.0
  %1502 = vmatpush.msra.mxu0 0.0
  %1503 = vmatpush.msra.mxu0 0.0
  %1504 = vmatpush.msra.mxu0 0.0
  %1505 = vmatpush.msra.mxu0 0.0
  %1506 = vmatpush.msra.mxu0 %v1448
  %1507 = vmatpush.msra.mxu0 %v1440
  %1508 = vmatpush.msra.mxu0 %v1432
  %1509 = vmatpush.msra.mxu0 %v1424
  %1510 = vmatpush.msra.mxu0 %v1416
  %1511 = vmatpush.msra.mxu0 %v1408
  %1512 = vmatpush.msra.mxu0 %v1400
  %1513 = vmatmul.f32.gmra.mxu0 %v1455
  %v1514 = vpop.f32.mrf.mxu0
  %v1515 = vadd.f32 0.0, %v1514
  %1516 = vdwg.mxu0
  %1517 = vmatpush.msra.mxu0 0.0
  %1518 = vmatpush.msra.mxu0 0.0
  %1519 = vmatpush.msra.mxu0 0.0
  %1520 = vmatpush.msra.mxu0 0.0
  %1521 = vmatpush.msra.mxu0 0.0
  %1522 = vmatpush.msra.mxu0 0.0
  %1523 = vmatpush.msra.mxu0 0.0
  %1524 = vmatpush.msra.mxu0 0.0
  %1525 = vmatpush.msra.mxu0 0.0
  %1526 = vmatpush.msra.mxu0 %v1449
  %1527 = vmatpush.msra.mxu0 %v1441
  %1528 = vmatpush.msra.mxu0 %v1433
  %1529 = vmatpush.msra.mxu0 %v1425
  %1530 = vmatpush.msra.mxu0 %v1417
  %1531 = vmatpush.msra.mxu0 %v1409
  %1532 = vmatpush.msra.mxu0 %v1401
  %1533 = vmatmul.f32.gmra.mxu0 %v1455
  %v1534 = vpop.f32.mrf.mxu0
  %v1535 = vadd.f32 0.0, %v1534
  %1536 = vdwg.mxu0
  %1537 = vmatpush.msra.mxu0 0.0
  %1538 = vmatpush.msra.mxu0 0.0
  %1539 = vmatpush.msra.mxu0 0.0
  %1540 = vmatpush.msra.mxu0 0.0
  %1541 = vmatpush.msra.mxu0 0.0
  %1542 = vmatpush.msra.mxu0 0.0
  %1543 = vmatpush.msra.mxu0 0.0
  %1544 = vmatpush.msra.mxu0 0.0
  %1545 = vmatpush.msra.mxu0 0.0
  %1546 = vmatpush.msra.mxu0 %v1450
  %1547 = vmatpush.msra.mxu0 %v1442
  %1548 = vmatpush.msra.mxu0 %v1434
  %1549 = vmatpush.msra.mxu0 %v1426
  %1550 = vmatpush.msra.mxu0 %v1418
  %1551 = vmatpush.msra.mxu0 %v1410
  %1552 = vmatpush.msra.mxu0 %v1402
  %1553 = vmatmul.f32.gmra.mxu0 %v1455
  %v1554 = vpop.f32.mrf.mxu0
  %v1555 = vadd.f32 0.0, %v1554
  %1556 = vdwg.mxu0
  %1557 = vmatpush.msra.mxu0 0.0
  %1558 = vmatpush.msra.mxu0 0.0
  %1559 = vmatpush.msra.mxu0 0.0
  %1560 = vmatpush.msra.mxu0 0.0
  %1561 = vmatpush.msra.mxu0 0.0
  %1562 = vmatpush.msra.mxu0 0.0
  %1563 = vmatpush.msra.mxu0 0.0
  %1564 = vmatpush.msra.mxu0 0.0
  %1565 = vmatpush.msra.mxu0 0.0
  %1566 = vmatpush.msra.mxu0 %v1451
  %1567 = vmatpush.msra.mxu0 %v1443
  %1568 = vmatpush.msra.mxu0 %v1435
  %1569 = vmatpush.msra.mxu0 %v1427
  %1570 = vmatpush.msra.mxu0 %v1419
  %1571 = vmatpush.msra.mxu0 %v1411
  %1572 = vmatpush.msra.mxu0 %v1403
  %1573 = vmatmul.f32.gmra.mxu0 %v1455
  %v1574 = vpop.f32.mrf.mxu0
  %v1575 = vadd.f32 0.0, %v1574
  %1576 = vdwg.mxu0
  %1577 = vmatpush.msra.mxu0 0.0
  %1578 = vmatpush.msra.mxu0 0.0
  %1579 = vmatpush.msra.mxu0 0.0
  %1580 = vmatpush.msra.mxu0 0.0
  %1581 = vmatpush.msra.mxu0 0.0
  %1582 = vmatpush.msra.mxu0 0.0
  %1583 = vmatpush.msra.mxu0 0.0
  %1584 = vmatpush.msra.mxu0 0.0
  %1585 = vmatpush.msra.mxu0 0.0
  %1586 = vmatpush.msra.mxu0 %v1452
  %1587 = vmatpush.msra.mxu0 %v1444
  %1588 = vmatpush.msra.mxu0 %v1436
  %1589 = vmatpush.msra.mxu0 %v1428
  %1590 = vmatpush.msra.mxu0 %v1420
  %1591 = vmatpush.msra.mxu0 %v1412
  %1592 = vmatpush.msra.mxu0 %v1404
  %1593 = vmatmul.f32.gmra.mxu0 %v1455
  %v1594 = vpop.f32.mrf.mxu0
  %v1595 = vadd.f32 0.0, %v1594
  %1596 = vdwg.mxu0
  %1597 = vmatpush.msra.mxu0 0.0
  %1598 = vmatpush.msra.mxu0 0.0
  %1599 = vmatpush.msra.mxu0 0.0
  %1600 = vmatpush.msra.mxu0 0.0
  %1601 = vmatpush.msra.mxu0 0.0
  %1602 = vmatpush.msra.mxu0 0.0
  %1603 = vmatpush.msra.mxu0 0.0
  %1604 = vmatpush.msra.mxu0 0.0
  %1605 = vmatpush.msra.mxu0 0.0
  %1606 = vmatpush.msra.mxu0 %v1453
  %1607 = vmatpush.msra.mxu0 %v1445
  %1608 = vmatpush.msra.mxu0 %v1437
  %1609 = vmatpush.msra.mxu0 %v1429
  %1610 = vmatpush.msra.mxu0 %v1421
  %1611 = vmatpush.msra.mxu0 %v1413
  %1612 = vmatpush.msra.mxu0 %v1405
  %1613 = vmatmul.f32.gmra.mxu0 %v1455
  %v1614 = vpop.f32.mrf.mxu0
  %v1615 = vadd.f32 0.0, %v1614
  %1616 = vdwg.mxu0
  %1617 = vst [vmem:[%s2] sm:$0xff] %v1475
  %1618 = vst [vmem:[%s2 + $0x8] sm:$0xff] %v1495
  %1619 = vst [vmem:[%s2 + $0x10] sm:$0xff] %v1515
  %1620 = vst [vmem:[%s2 + $0x18] sm:$0xff] %v1535
  %1621 = vst [vmem:[%s2 + $0x20] sm:$0xff] %v1555
  %1622 = vst [vmem:[%s2 + $0x28] sm:$0xff] %v1575
  %1623 = vst [vmem:[%s2 + $0x30] sm:$0xff] %v1595
  %1624 = vst [vmem:[%s2 + $0x38] sm:$0xff] %v1615
  // Predicated region
  $region10: #{kagome_forward.1} parent=0 // pred_check
    _
  $region11: #{kagome_forward.1} parent=0 // pred_check_branch
    %1626 = sbr.rel (0) target = $region13
  $region12: #{kagome_forward.1} parent=0 // pred_region
    _
  $region13: #{kagome_forward.1} parent=0 // pred_fallthru
    _
  // Predicated region
  $region14: #{kagome_forward.1} parent=0 // pred_check
    _
  $region15: #{kagome_forward.1} parent=0 // pred_check_branch
    %1628 = sbr.rel (0) target = $region17
  $region16: #{kagome_forward.1} parent=0 // pred_region
    _
  $region17: #{kagome_forward.1} parent=0 // pred_fallthru
    _

</llo_original>
